<compile_context>
chip_gen: v6e
topology: v6e:2x2x1
jax: 0.10.0
libtpu: 0.0.40
codegen_flags: <defaults>
</compile_context>

<pallas_src>
import jax
import jax.numpy as jnp
from jax.experimental import pallas as pl
from jax.experimental.pallas import tpu as pltpu

ENC_DIMS = [256, 128, 64, 32, 3]   # encoder layer output dims
DEC_DIMS = [32, 64, 128, 256]      # decoder hidden dims (+ input_size at the end)
_BOTTLENECK_IDX = len(ENC_DIMS) - 1  # the 32->3 linear (no activation)


# --------------------------------------------------------------------------- #
# Parameters
# --------------------------------------------------------------------------- #
def init_params(key, input_size):
    """PyTorch-style uniform(+/- 1/sqrt(fan_in)) init; W stored [in, out], b [1, out]."""
    dims = [input_size] + ENC_DIMS + DEC_DIMS + [input_size]
    params = []
    for i in range(len(dims) - 1):
        fan_in, fan_out = dims[i], dims[i + 1]
        key, kw, kb = jax.random.split(key, 3)
        bound = 1.0 / (fan_in ** 0.5)
        w = jax.random.uniform(kw, (fan_in, fan_out), jnp.float32, -bound, bound)
        b = jax.random.uniform(kb, (1, fan_out), jnp.float32, -bound, bound)
        params.append((w, b))
    return params


def fuse_and_cast_params(params, weight_dtype=jnp.bfloat16):
    """Fuse the activation-free 32->3->32 bottleneck into one 32x32 linear and
    cast the weights to bf16 (biases stay f32). Done once, outside the kernel."""
    fused = []
    i = 0
    while i < len(params):
        w, b = params[i]
        if i == _BOTTLENECK_IDX:
            w2, b2 = params[i + 1]        # the 3->32 decoder linear
            w = w @ w2                    # [32,3] @ [3,32] -> [32,32]
            b = b @ w2 + b2               # [1,32]
            i += 2
        else:
            i += 1
        fused.append((w.astype(weight_dtype), b.astype(jnp.float32)))
    return fused                           # 9 layers: 8x ReLU + final Sigmoid


# --------------------------------------------------------------------------- #
# Kernel
# --------------------------------------------------------------------------- #
def _ae_kernel(x_ref, *refs):
    """One batch-row tile through all (fused) layers: 9 matmuls + ReLU/Sigmoid."""
    *param_refs, o_ref = refs
    n_layers = len(param_refs) // 2
    h = x_ref[...]                                      # [TM, D] f32
    for i in range(n_layers):
        w = param_refs[2 * i][...]                      # bf16 [in, out]
        b = param_refs[2 * i + 1][...]                  # f32  [1, out]
        h = jnp.dot(h.astype(w.dtype), w,
                    preferred_element_type=jnp.float32) + b
        if i == n_layers - 1:
            h = jax.nn.sigmoid(h)                       # final decoder layer
        else:
            h = jnp.maximum(h, 0.0)                     # ReLU
    o_ref[...] = h.astype(o_ref.dtype)


# --------------------------------------------------------------------------- #
# Wrapper
# --------------------------------------------------------------------------- #
def _round_up(x, m):
    return (x + m - 1) // m * m


def enhanced_autoencoder(x, fused_params, *, max_row_tile=512):
    b = x.shape[0]
    x_flat = x.reshape(b, -1).astype(jnp.float32)       # x.view(x.size(0), -1)
    d = x_flat.shape[1]

    # Row tile: at least sublane-aligned (8); 512 rows (mult of 128 and 256,
    # safely under v7x's 64 MiB VMEM with double buffering) at large batch.
    tm = max_row_tile if b >= max_row_tile else _round_up(b, 8)
    b_pad = _round_up(b, tm)
    if b_pad != b:
        x_flat = jnp.pad(x_flat, ((0, b_pad - b), (0, 0)))

    flat_params = []
    for w, bias in fused_params:
        flat_params += [w, bias]

    def _const_spec(arr):                 # weights/biases resident across the grid
        return pl.BlockSpec(arr.shape, lambda i: (0,) * arr.ndim)

    in_specs = [pl.BlockSpec((tm, d), lambda i: (i, 0))]
    in_specs += [_const_spec(p) for p in flat_params]
    out_specs = pl.BlockSpec((tm, d), lambda i: (i, 0))

    # Advisory cost estimate for the XLA scheduler.
    layer_dims = [(w.shape[0], w.shape[1]) for w, _ in fused_params]
    flops = 2 * b_pad * sum(di * do for di, do in layer_dims)
    weight_bytes = sum(int(w.size) * w.dtype.itemsize + int(bb.size) * bb.dtype.itemsize
                       for w, bb in fused_params)
    cost = pl.CostEstimate(
        flops=int(flops),
        transcendentals=int(b_pad * d),                  # final sigmoid
        bytes_accessed=int(weight_bytes + 2 * b_pad * d * 4),
    )

    out = pl.pallas_call(
        _ae_kernel,
        out_shape=jax.ShapeDtypeStruct((b_pad, d), jnp.float32),
        grid=(b_pad // tm,),
        in_specs=in_specs,
        out_specs=out_specs,
        compiler_params=pltpu.CompilerParams(
            dimension_semantics=("parallel",),
            vmem_limit_bytes=64 * 1024 * 1024,
        ),
        cost_estimate=cost,
    )(x_flat, *flat_params)
    return out[:b]


# --------------------------------------------------------------------------- #
# References
# --------------------------------------------------------------------------- #
def _reference_exact(x, fused_params):
    """Same numeric pipeline as the kernel (bf16 weights+activations in the dot,
    f32 accumulate, fused bottleneck). Tight tolerance check."""
    h = x.reshape(x.shape[0], -1).astype(jnp.float32)
    n = len(fused_params)
    for i, (w, bias) in enumerate(fused_params):
        h = jnp.dot(h.astype(w.dtype), w, preferred_element_type=jnp.float32) + bias
        h = jax.nn.sigmoid(h) if i == n - 1 else jnp.maximum(h, 0.0)
    return h


def _reference_f32(x, params):
    """Pure-f32, unfused reference of the original PyTorch forward (semantics)."""
    h = x.reshape(x.shape[0], -1).astype(jnp.float32)
    n = len(params)
    for i, (w, bias) in enumerate(params):
        h = jnp.dot(h, w, preferred_element_type=jnp.float32) + bias
        if i == n - 1:
            h = jax.nn.sigmoid(h)
        elif i == _BOTTLENECK_IDX:
            pass                                         # bottleneck: no activation
        else:
            h = jnp.maximum(h, 0.0)
    return h


# --------------------------------------------------------------------------- #
if __name__ == "__main__":
    key = jax.random.PRNGKey(0)
    # Small NCHW input: batch=2, channels=4, spatial=16x16  ->  input_size=1024
    x = jax.random.uniform(jax.random.fold_in(key, 1), (2, 4, 16, 16), jnp.float32)
    input_size = 4 * 16 * 16
    params = init_params(jax.random.fold_in(key, 2), input_size)
    fused_params = fuse_and_cast_params(params)

    out = enhanced_autoencoder(x, fused_params)
    jax.block_until_ready(out)
    assert out.shape == (2, input_size), out.shape

    # Tight check: identical bf16/fused numerics.
    ref_exact = _reference_exact(x, fused_params)
    assert jnp.allclose(out, ref_exact, rtol=1e-3, atol=1e-3), "mismatch vs exact reference"

    # Semantic check vs the original f32, unfused PyTorch forward (bf16 weights
    # and the bottleneck fusion change rounding slightly; output is post-sigmoid).
    ref_f32 = _reference_f32(x, params)
    assert jnp.allclose(out, ref_f32, rtol=1e-2, atol=5e-2), "mismatch vs f32 reference"

    print("KERNEL_OK")
</pallas_src>

<mosaic_0001>
module attributes {stable_mosaic.version = 11 : i64} {
  func.func @_ae_kernel(%arg0: i32, %arg1: memref<8x1024xf32, #tpu.memory_space<vmem>>, %arg2: memref<1024x256xbf16, #tpu.memory_space<vmem>>, %arg3: memref<1x256xf32, #tpu.memory_space<vmem>>, %arg4: memref<256x128xbf16, #tpu.memory_space<vmem>>, %arg5: memref<1x128xf32, #tpu.memory_space<vmem>>, %arg6: memref<128x64xbf16, #tpu.memory_space<vmem>>, %arg7: memref<1x64xf32, #tpu.memory_space<vmem>>, %arg8: memref<64x32xbf16, #tpu.memory_space<vmem>>, %arg9: memref<1x32xf32, #tpu.memory_space<vmem>>, %arg10: memref<32x32xbf16, #tpu.memory_space<vmem>>, %arg11: memref<1x32xf32, #tpu.memory_space<vmem>>, %arg12: memref<32x64xbf16, #tpu.memory_space<vmem>>, %arg13: memref<1x64xf32, #tpu.memory_space<vmem>>, %arg14: memref<64x128xbf16, #tpu.memory_space<vmem>>, %arg15: memref<1x128xf32, #tpu.memory_space<vmem>>, %arg16: memref<128x256xbf16, #tpu.memory_space<vmem>>, %arg17: memref<1x256xf32, #tpu.memory_space<vmem>>, %arg18: memref<256x1024xbf16, #tpu.memory_space<vmem>>, %arg19: memref<1x1024xf32, #tpu.memory_space<vmem>>, %arg20: memref<8x1024xf32, #tpu.memory_space<vmem>>) attributes {dimension_semantics = [#tpu.dimension_semantics<parallel>], iteration_bounds = array<i64: 1>, scalar_prefetch = 0 : i64, scratch_operands = 0 : i64, tpu.core_type = #tpu.core_type<tc>, window_params = [{transform_indices = @transform_0, window_bounds = array<i64: 8, 1024>}, {pipeline_mode = #tpu.pipeline_mode<synchronous>, transform_indices = @transform_1, window_bounds = array<i64: 1024, 256>}, {pipeline_mode = #tpu.pipeline_mode<synchronous>, transform_indices = @transform_2, window_bounds = array<i64: 1, 256>}, {pipeline_mode = #tpu.pipeline_mode<synchronous>, transform_indices = @transform_3, window_bounds = array<i64: 256, 128>}, {pipeline_mode = #tpu.pipeline_mode<synchronous>, transform_indices = @transform_4, window_bounds = array<i64: 1, 128>}, {pipeline_mode = #tpu.pipeline_mode<synchronous>, transform_indices = @transform_5, window_bounds = array<i64: 128, 64>}, {pipeline_mode = #tpu.pipeline_mode<synchronous>, transform_indices = @transform_6, window_bounds = array<i64: 1, 64>}, {pipeline_mode = #tpu.pipeline_mode<synchronous>, transform_indices = @transform_7, window_bounds = array<i64: 64, 32>}, {pipeline_mode = #tpu.pipeline_mode<synchronous>, transform_indices = @transform_8, window_bounds = array<i64: 1, 32>}, {pipeline_mode = #tpu.pipeline_mode<synchronous>, transform_indices = @transform_9, window_bounds = array<i64: 32, 32>}, {pipeline_mode = #tpu.pipeline_mode<synchronous>, transform_indices = @transform_10, window_bounds = array<i64: 1, 32>}, {pipeline_mode = #tpu.pipeline_mode<synchronous>, transform_indices = @transform_11, window_bounds = array<i64: 32, 64>}, {pipeline_mode = #tpu.pipeline_mode<synchronous>, transform_indices = @transform_12, window_bounds = array<i64: 1, 64>}, {pipeline_mode = #tpu.pipeline_mode<synchronous>, transform_indices = @transform_13, window_bounds = array<i64: 64, 128>}, {pipeline_mode = #tpu.pipeline_mode<synchronous>, transform_indices = @transform_14, window_bounds = array<i64: 1, 128>}, {pipeline_mode = #tpu.pipeline_mode<synchronous>, transform_indices = @transform_15, window_bounds = array<i64: 128, 256>}, {pipeline_mode = #tpu.pipeline_mode<synchronous>, transform_indices = @transform_16, window_bounds = array<i64: 1, 256>}, {pipeline_mode = #tpu.pipeline_mode<synchronous>, transform_indices = @transform_17, window_bounds = array<i64: 256, 1024>}, {pipeline_mode = #tpu.pipeline_mode<synchronous>, transform_indices = @transform_18, window_bounds = array<i64: 1, 1024>}, {transform_indices = @transform_19, window_bounds = array<i64: 8, 1024>}]} {
    %c0 = arith.constant 0 : index
    %c0_0 = arith.constant 0 : index
    %0 = vector.load %arg1[%c0, %c0_0] : memref<8x1024xf32, #tpu.memory_space<vmem>>, vector<8x1024xf32>
    %c0_1 = arith.constant 0 : index
    %c0_2 = arith.constant 0 : index
    %1 = vector.load %arg2[%c0_1, %c0_2] : memref<1024x256xbf16, #tpu.memory_space<vmem>>, vector<1024x256xbf16>
    %c0_3 = arith.constant 0 : index
    %c0_4 = arith.constant 0 : index
    %2 = vector.load %arg3[%c0_3, %c0_4] : memref<1x256xf32, #tpu.memory_space<vmem>>, vector<1x256xf32>
    %3 = arith.truncf %0 : vector<8x1024xf32> to vector<8x1024xbf16>
    %cst = arith.constant dense<0.000000e+00> : vector<8x256xf32>
    %4 = tpu.matmul %3, %1, %cst {dimension_numbers = #tpu.dot_dimension_numbers<[1], [0], [0], [1], [0, 0, 1, 1], [], []>} : vector<8x1024xbf16>, vector<1024x256xbf16>, vector<8x256xf32> -> vector<8x256xf32>
    %5 = vector.broadcast %2 : vector<1x256xf32> to vector<8x256xf32>
    %6 = arith.addf %4, %5 : vector<8x256xf32>
    %cst_5 = arith.constant 0.000000e+00 : f32
    %7 = vector.broadcast %cst_5 : f32 to vector<8x256xf32>
    %8 = arith.maximumf %6, %7 : vector<8x256xf32>
    %c0_6 = arith.constant 0 : index
    %c0_7 = arith.constant 0 : index
    %9 = vector.load %arg4[%c0_6, %c0_7] : memref<256x128xbf16, #tpu.memory_space<vmem>>, vector<256x128xbf16>
    %c0_8 = arith.constant 0 : index
    %c0_9 = arith.constant 0 : index
    %10 = vector.load %arg5[%c0_8, %c0_9] : memref<1x128xf32, #tpu.memory_space<vmem>>, vector<1x128xf32>
    %11 = arith.truncf %8 : vector<8x256xf32> to vector<8x256xbf16>
    %cst_10 = arith.constant dense<0.000000e+00> : vector<8x128xf32>
    %12 = tpu.matmul %11, %9, %cst_10 {dimension_numbers = #tpu.dot_dimension_numbers<[1], [0], [0], [1], [0, 0, 1, 1], [], []>} : vector<8x256xbf16>, vector<256x128xbf16>, vector<8x128xf32> -> vector<8x128xf32>
    %13 = vector.broadcast %10 : vector<1x128xf32> to vector<8x128xf32>
    %14 = arith.addf %12, %13 : vector<8x128xf32>
    %cst_11 = arith.constant 0.000000e+00 : f32
    %15 = vector.broadcast %cst_11 : f32 to vector<8x128xf32>
    %16 = arith.maximumf %14, %15 : vector<8x128xf32>
    %c0_12 = arith.constant 0 : index
    %c0_13 = arith.constant 0 : index
    %17 = vector.load %arg6[%c0_12, %c0_13] : memref<128x64xbf16, #tpu.memory_space<vmem>>, vector<128x64xbf16>
    %c0_14 = arith.constant 0 : index
    %c0_15 = arith.constant 0 : index
    %18 = vector.load %arg7[%c0_14, %c0_15] : memref<1x64xf32, #tpu.memory_space<vmem>>, vector<1x64xf32>
    %19 = arith.truncf %16 : vector<8x128xf32> to vector<8x128xbf16>
    %cst_16 = arith.constant dense<0.000000e+00> : vector<8x64xf32>
    %20 = tpu.matmul %19, %17, %cst_16 {dimension_numbers = #tpu.dot_dimension_numbers<[1], [0], [0], [1], [0, 0, 1, 1], [], []>} : vector<8x128xbf16>, vector<128x64xbf16>, vector<8x64xf32> -> vector<8x64xf32>
    %21 = vector.broadcast %18 : vector<1x64xf32> to vector<8x64xf32>
    %22 = arith.addf %20, %21 : vector<8x64xf32>
    %cst_17 = arith.constant 0.000000e+00 : f32
    %23 = vector.broadcast %cst_17 : f32 to vector<8x64xf32>
    %24 = arith.maximumf %22, %23 : vector<8x64xf32>
    %c0_18 = arith.constant 0 : index
    %c0_19 = arith.constant 0 : index
    %25 = vector.load %arg8[%c0_18, %c0_19] : memref<64x32xbf16, #tpu.memory_space<vmem>>, vector<64x32xbf16>
    %c0_20 = arith.constant 0 : index
    %c0_21 = arith.constant 0 : index
    %26 = vector.load %arg9[%c0_20, %c0_21] : memref<1x32xf32, #tpu.memory_space<vmem>>, vector<1x32xf32>
    %27 = arith.truncf %24 : vector<8x64xf32> to vector<8x64xbf16>
    %cst_22 = arith.constant dense<0.000000e+00> : vector<8x32xf32>
    %28 = tpu.matmul %27, %25, %cst_22 {dimension_numbers = #tpu.dot_dimension_numbers<[1], [0], [0], [1], [0, 0, 1, 1], [], []>} : vector<8x64xbf16>, vector<64x32xbf16>, vector<8x32xf32> -> vector<8x32xf32>
    %29 = vector.broadcast %26 : vector<1x32xf32> to vector<8x32xf32>
    %30 = arith.addf %28, %29 : vector<8x32xf32>
    %cst_23 = arith.constant 0.000000e+00 : f32
    %31 = vector.broadcast %cst_23 : f32 to vector<8x32xf32>
    %32 = arith.maximumf %30, %31 : vector<8x32xf32>
    %c0_24 = arith.constant 0 : index
    %c0_25 = arith.constant 0 : index
    %33 = vector.load %arg10[%c0_24, %c0_25] : memref<32x32xbf16, #tpu.memory_space<vmem>>, vector<32x32xbf16>
    %c0_26 = arith.constant 0 : index
    %c0_27 = arith.constant 0 : index
    %34 = vector.load %arg11[%c0_26, %c0_27] : memref<1x32xf32, #tpu.memory_space<vmem>>, vector<1x32xf32>
    %35 = arith.truncf %32 : vector<8x32xf32> to vector<8x32xbf16>
    %cst_28 = arith.constant dense<0.000000e+00> : vector<8x32xf32>
    %36 = tpu.matmul %35, %33, %cst_28 {dimension_numbers = #tpu.dot_dimension_numbers<[1], [0], [0], [1], [0, 0, 1, 1], [], []>} : vector<8x32xbf16>, vector<32x32xbf16>, vector<8x32xf32> -> vector<8x32xf32>
    %37 = vector.broadcast %34 : vector<1x32xf32> to vector<8x32xf32>
    %38 = arith.addf %36, %37 : vector<8x32xf32>
    %cst_29 = arith.constant 0.000000e+00 : f32
    %39 = vector.broadcast %cst_29 : f32 to vector<8x32xf32>
    %40 = arith.maximumf %38, %39 : vector<8x32xf32>
    %c0_30 = arith.constant 0 : index
    %c0_31 = arith.constant 0 : index
    %41 = vector.load %arg12[%c0_30, %c0_31] : memref<32x64xbf16, #tpu.memory_space<vmem>>, vector<32x64xbf16>
    %c0_32 = arith.constant 0 : index
    %c0_33 = arith.constant 0 : index
    %42 = vector.load %arg13[%c0_32, %c0_33] : memref<1x64xf32, #tpu.memory_space<vmem>>, vector<1x64xf32>
    %43 = arith.truncf %40 : vector<8x32xf32> to vector<8x32xbf16>
    %cst_34 = arith.constant dense<0.000000e+00> : vector<8x64xf32>
    %44 = tpu.matmul %43, %41, %cst_34 {dimension_numbers = #tpu.dot_dimension_numbers<[1], [0], [0], [1], [0, 0, 1, 1], [], []>} : vector<8x32xbf16>, vector<32x64xbf16>, vector<8x64xf32> -> vector<8x64xf32>
    %45 = vector.broadcast %42 : vector<1x64xf32> to vector<8x64xf32>
    %46 = arith.addf %44, %45 : vector<8x64xf32>
    %cst_35 = arith.constant 0.000000e+00 : f32
    %47 = vector.broadcast %cst_35 : f32 to vector<8x64xf32>
    %48 = arith.maximumf %46, %47 : vector<8x64xf32>
    %c0_36 = arith.constant 0 : index
    %c0_37 = arith.constant 0 : index
    %49 = vector.load %arg14[%c0_36, %c0_37] : memref<64x128xbf16, #tpu.memory_space<vmem>>, vector<64x128xbf16>
    %c0_38 = arith.constant 0 : index
    %c0_39 = arith.constant 0 : index
    %50 = vector.load %arg15[%c0_38, %c0_39] : memref<1x128xf32, #tpu.memory_space<vmem>>, vector<1x128xf32>
    %51 = arith.truncf %48 : vector<8x64xf32> to vector<8x64xbf16>
    %cst_40 = arith.constant dense<0.000000e+00> : vector<8x128xf32>
    %52 = tpu.matmul %51, %49, %cst_40 {dimension_numbers = #tpu.dot_dimension_numbers<[1], [0], [0], [1], [0, 0, 1, 1], [], []>} : vector<8x64xbf16>, vector<64x128xbf16>, vector<8x128xf32> -> vector<8x128xf32>
    %53 = vector.broadcast %50 : vector<1x128xf32> to vector<8x128xf32>
    %54 = arith.addf %52, %53 : vector<8x128xf32>
    %cst_41 = arith.constant 0.000000e+00 : f32
    %55 = vector.broadcast %cst_41 : f32 to vector<8x128xf32>
    %56 = arith.maximumf %54, %55 : vector<8x128xf32>
    %c0_42 = arith.constant 0 : index
    %c0_43 = arith.constant 0 : index
    %57 = vector.load %arg16[%c0_42, %c0_43] : memref<128x256xbf16, #tpu.memory_space<vmem>>, vector<128x256xbf16>
    %c0_44 = arith.constant 0 : index
    %c0_45 = arith.constant 0 : index
    %58 = vector.load %arg17[%c0_44, %c0_45] : memref<1x256xf32, #tpu.memory_space<vmem>>, vector<1x256xf32>
    %59 = arith.truncf %56 : vector<8x128xf32> to vector<8x128xbf16>
    %cst_46 = arith.constant dense<0.000000e+00> : vector<8x256xf32>
    %60 = tpu.matmul %59, %57, %cst_46 {dimension_numbers = #tpu.dot_dimension_numbers<[1], [0], [0], [1], [0, 0, 1, 1], [], []>} : vector<8x128xbf16>, vector<128x256xbf16>, vector<8x256xf32> -> vector<8x256xf32>
    %61 = vector.broadcast %58 : vector<1x256xf32> to vector<8x256xf32>
    %62 = arith.addf %60, %61 : vector<8x256xf32>
    %cst_47 = arith.constant 0.000000e+00 : f32
    %63 = vector.broadcast %cst_47 : f32 to vector<8x256xf32>
    %64 = arith.maximumf %62, %63 : vector<8x256xf32>
    %c0_48 = arith.constant 0 : index
    %c0_49 = arith.constant 0 : index
    %65 = vector.load %arg18[%c0_48, %c0_49] : memref<256x1024xbf16, #tpu.memory_space<vmem>>, vector<256x1024xbf16>
    %c0_50 = arith.constant 0 : index
    %c0_51 = arith.constant 0 : index
    %66 = vector.load %arg19[%c0_50, %c0_51] : memref<1x1024xf32, #tpu.memory_space<vmem>>, vector<1x1024xf32>
    %67 = arith.truncf %64 : vector<8x256xf32> to vector<8x256xbf16>
    %cst_52 = arith.constant dense<0.000000e+00> : vector<8x1024xf32>
    %68 = tpu.matmul %67, %65, %cst_52 {dimension_numbers = #tpu.dot_dimension_numbers<[1], [0], [0], [1], [0, 0, 1, 1], [], []>} : vector<8x256xbf16>, vector<256x1024xbf16>, vector<8x1024xf32> -> vector<8x1024xf32>
    %69 = vector.broadcast %66 : vector<1x1024xf32> to vector<8x1024xf32>
    %70 = arith.addf %68, %69 : vector<8x1024xf32>
    %71 = arith.negf %70 : vector<8x1024xf32>
    %72 = math.exp %71 : vector<8x1024xf32>
    %cst_53 = arith.constant 1.000000e+00 : f32
    %73 = vector.broadcast %cst_53 : f32 to vector<8x1024xf32>
    %74 = arith.addf %73, %72 : vector<8x1024xf32>
    %75 = arith.divf %73, %74 : vector<8x1024xf32>
    %c0_54 = arith.constant 0 : index
    %c0_55 = arith.constant 0 : index
    %76 = vector.load %arg20[%c0_54, %c0_55] : memref<8x1024xf32, #tpu.memory_space<vmem>>, vector<8x1024xf32>
    tpu.vector_store %arg20[%c0_54, %c0_55], %75 {strides = array<i32>} : memref<8x1024xf32, #tpu.memory_space<vmem>>, vector<8x1024xf32>,
    return
  }
  func.func @transform_0(%arg0: i32) -> (i32, i32) {
    %c0_i32 = arith.constant 0 : i32
    %c0_i32_0 = arith.constant 0 : i32
    return %arg0, %c0_i32 : i32, i32
  }
  func.func @transform_1(%arg0: i32) -> (i32, i32) {
    %c0_i32 = arith.constant 0 : i32
    %c0_i32_0 = arith.constant 0 : i32
    %c0_i32_1 = arith.constant 0 : i32
    return %c0_i32, %c0_i32_0 : i32, i32
  }
  func.func @transform_2(%arg0: i32) -> (i32, i32) {
    %c0_i32 = arith.constant 0 : i32
    %c0_i32_0 = arith.constant 0 : i32
    %c0_i32_1 = arith.constant 0 : i32
    return %c0_i32, %c0_i32_0 : i32, i32
  }
  func.func @transform_3(%arg0: i32) -> (i32, i32) {
    %c0_i32 = arith.constant 0 : i32
    %c0_i32_0 = arith.constant 0 : i32
    %c0_i32_1 = arith.constant 0 : i32
    return %c0_i32, %c0_i32_0 : i32, i32
  }
  func.func @transform_4(%arg0: i32) -> (i32, i32) {
    %c0_i32 = arith.constant 0 : i32
    %c0_i32_0 = arith.constant 0 : i32
    %c0_i32_1 = arith.constant 0 : i32
    return %c0_i32, %c0_i32_0 : i32, i32
  }
  func.func @transform_5(%arg0: i32) -> (i32, i32) {
    %c0_i32 = arith.constant 0 : i32
    %c0_i32_0 = arith.constant 0 : i32
    %c0_i32_1 = arith.constant 0 : i32
    return %c0_i32, %c0_i32_0 : i32, i32
  }
  func.func @transform_6(%arg0: i32) -> (i32, i32) {
    %c0_i32 = arith.constant 0 : i32
    %c0_i32_0 = arith.constant 0 : i32
    %c0_i32_1 = arith.constant 0 : i32
    return %c0_i32, %c0_i32_0 : i32, i32
  }
  func.func @transform_7(%arg0: i32) -> (i32, i32) {
    %c0_i32 = arith.constant 0 : i32
    %c0_i32_0 = arith.constant 0 : i32
    %c0_i32_1 = arith.constant 0 : i32
    return %c0_i32, %c0_i32_0 : i32, i32
  }
  func.func @transform_8(%arg0: i32) -> (i32, i32) {
    %c0_i32 = arith.constant 0 : i32
    %c0_i32_0 = arith.constant 0 : i32
    %c0_i32_1 = arith.constant 0 : i32
    return %c0_i32, %c0_i32_0 : i32, i32
  }
  func.func @transform_9(%arg0: i32) -> (i32, i32) {
    %c0_i32 = arith.constant 0 : i32
    %c0_i32_0 = arith.constant 0 : i32
    %c0_i32_1 = arith.constant 0 : i32
    return %c0_i32, %c0_i32_0 : i32, i32
  }
  func.func @transform_10(%arg0: i32) -> (i32, i32) {
    %c0_i32 = arith.constant 0 : i32
    %c0_i32_0 = arith.constant 0 : i32
    %c0_i32_1 = arith.constant 0 : i32
    return %c0_i32, %c0_i32_0 : i32, i32
  }
  func.func @transform_11(%arg0: i32) -> (i32, i32) {
    %c0_i32 = arith.constant 0 : i32
    %c0_i32_0 = arith.constant 0 : i32
    %c0_i32_1 = arith.constant 0 : i32
    return %c0_i32, %c0_i32_0 : i32, i32
  }
  func.func @transform_12(%arg0: i32) -> (i32, i32) {
    %c0_i32 = arith.constant 0 : i32
    %c0_i32_0 = arith.constant 0 : i32
    %c0_i32_1 = arith.constant 0 : i32
    return %c0_i32, %c0_i32_0 : i32, i32
  }
  func.func @transform_13(%arg0: i32) -> (i32, i32) {
    %c0_i32 = arith.constant 0 : i32
    %c0_i32_0 = arith.constant 0 : i32
    %c0_i32_1 = arith.constant 0 : i32
    return %c0_i32, %c0_i32_0 : i32, i32
  }
  func.func @transform_14(%arg0: i32) -> (i32, i32) {
    %c0_i32 = arith.constant 0 : i32
    %c0_i32_0 = arith.constant 0 : i32
    %c0_i32_1 = arith.constant 0 : i32
    return %c0_i32, %c0_i32_0 : i32, i32
  }
  func.func @transform_15(%arg0: i32) -> (i32, i32) {
    %c0_i32 = arith.constant 0 : i32
    %c0_i32_0 = arith.constant 0 : i32
    %c0_i32_1 = arith.constant 0 : i32
    return %c0_i32, %c0_i32_0 : i32, i32
  }
  func.func @transform_16(%arg0: i32) -> (i32, i32) {
    %c0_i32 = arith.constant 0 : i32
    %c0_i32_0 = arith.constant 0 : i32
    %c0_i32_1 = arith.constant 0 : i32
    return %c0_i32, %c0_i32_0 : i32, i32
  }
  func.func @transform_17(%arg0: i32) -> (i32, i32) {
    %c0_i32 = arith.constant 0 : i32
    %c0_i32_0 = arith.constant 0 : i32
    %c0_i32_1 = arith.constant 0 : i32
    return %c0_i32, %c0_i32_0 : i32, i32
  }
  func.func @transform_18(%arg0: i32) -> (i32, i32) {
    %c0_i32 = arith.constant 0 : i32
    %c0_i32_0 = arith.constant 0 : i32
    %c0_i32_1 = arith.constant 0 : i32
    return %c0_i32, %c0_i32_0 : i32, i32
  }
  func.func @transform_19(%arg0: i32) -> (i32, i32) {
    %c0_i32 = arith.constant 0 : i32
    %c0_i32_0 = arith.constant 0 : i32
    return %arg0, %c0_i32 : i32, i32
  }
}

</mosaic_0001>

<llo_original>
// kernel: tpu_custom_call.1
$region0: #{tpu_custom_call.1}
  #allocation0 [shape = 'u32[]', space=smem, size = 0x4, offset = 0x4, fixed_abs, tag = 'smem constant byte address 0x4 - core index']
  #allocation1 [shape = 'u32[144,128]{1,0:T(1,128)}', space=vmem, size = 0x12000, scoped, tag = 'internal scratch']
  %s0 = inlined_call_operand.hbm [shape: f32[8,1024], index: 0, kind: input, shape index: {}]
  %s1 = inlined_call_operand.hbm [shape: bf16[1024,256], index: 1, kind: input, shape index: {}]
  %s2 = inlined_call_operand.hbm [shape: f32[1,256], index: 2, kind: input, shape index: {}]
  %s3 = inlined_call_operand.vmem [shape: bf16[256,128], index: 3, kind: input, shape index: {}]
  %s4 = inlined_call_operand.hbm [shape: f32[1,128], index: 4, kind: input, shape index: {}]
  %s5 = inlined_call_operand.vmem [shape: bf16[128,64], index: 5, kind: input, shape index: {}]
  %s6 = inlined_call_operand.hbm [shape: f32[1,64], index: 6, kind: input, shape index: {}]
  %s7 = inlined_call_operand.vmem [shape: bf16[64,32], index: 7, kind: input, shape index: {}]
  %s8 = inlined_call_operand.hbm [shape: f32[1,32], index: 8, kind: input, shape index: {}]
  %s9 = inlined_call_operand.hbm [shape: bf16[32,32], index: 9, kind: input, shape index: {}]
  %s10 = inlined_call_operand.vmem [shape: f32[1,32], index: 10, kind: input, shape index: {}]
  %s11 = inlined_call_operand.hbm [shape: bf16[32,64], index: 11, kind: input, shape index: {}]
  %s12 = inlined_call_operand.hbm [shape: f32[1,64], index: 12, kind: input, shape index: {}]
  %s13 = inlined_call_operand.vmem [shape: bf16[64,128], index: 13, kind: input, shape index: {}]
  %s14 = inlined_call_operand.hbm [shape: f32[1,128], index: 14, kind: input, shape index: {}]
  %s15 = inlined_call_operand.hbm [shape: bf16[128,256], index: 15, kind: input, shape index: {}]
  %s16 = inlined_call_operand.vmem [shape: f32[1,256], index: 16, kind: input, shape index: {}]
  %s17 = inlined_call_operand.hbm [shape: bf16[256,1024], index: 17, kind: input, shape index: {}]
  %s18 = inlined_call_operand.vmem [shape: f32[1,1024], index: 18, kind: input, shape index: {}]
  %s19 = inlined_call_operand.hbm [shape: f32[8,1024], index: 19, kind: output, shape index: {}]
  %s20 = sld [smem:[#allocation0]]
  $region134: #{tpu_custom_call.1} parent=0
    _
  %s22 = ssub.s32 1, %s20
  %s23 = scalar_select 0, %s22, %s20
  $region1: #{tpu_custom_call.1} parent=0
    #allocation2 [shape = 'u8[32768]{0}', space=vmem, size = 0x8000, scoped, tag = 'input window, operand 0, single buffered']
    #allocation3 [shape = 's32[1]{0}', space=sflag, size = 0x4, scoped, tag = 'scoped memory for tpu_custom_call.1']
    #allocation4 [shape = 's32[1]{0}', space=sflag, size = 0x4, scoped, tag = 'scoped memory for tpu_custom_call.1']
    #allocation5 [shape = 'u8[524288]{0}', space=vmem, size = 0x80000, scoped, tag = 'input window, operand 1, single buffered']
    #allocation6 [shape = 's32[1]{0}', space=sflag, size = 0x4, scoped, tag = 'scoped memory for tpu_custom_call.1']
    #allocation7 [shape = 'u8[1024]{0}', space=vmem, size = 0x400, scoped, tag = 'input window, operand 2, single buffered']
    #allocation8 [shape = 'u8[512]{0}', space=vmem, size = 0x400, scoped, tag = 'input window, operand 4, single buffered']
    #allocation9 [shape = 's32[1]{0}', space=sflag, size = 0x4, scoped, tag = 'scoped memory for tpu_custom_call.1']
    #allocation10 [shape = 'u8[512]{0}', space=vmem, size = 0x400, scoped, tag = 'input window, operand 6, single buffered']
    #allocation11 [shape = 'u8[512]{0}', space=vmem, size = 0x400, scoped, tag = 'input window, operand 8, single buffered']
    #allocation12 [shape = 's32[1]{0}', space=sflag, size = 0x4, scoped, tag = 'scoped memory for tpu_custom_call.1']
    #allocation13 [shape = 'u8[8192]{0}', space=vmem, size = 0x2000, scoped, tag = 'input window, operand 9, single buffered']
    #allocation14 [shape = 'u8[8192]{0}', space=vmem, size = 0x2000, scoped, tag = 'input window, operand 11, single buffered']
    #allocation15 [shape = 's32[1]{0}', space=sflag, size = 0x4, scoped, tag = 'scoped memory for tpu_custom_call.1']
    #allocation16 [shape = 'u8[512]{0}', space=vmem, size = 0x400, scoped, tag = 'input window, operand 12, single buffered']
    #allocation17 [shape = 'u8[512]{0}', space=vmem, size = 0x400, scoped, tag = 'input window, operand 14, single buffered']
    #allocation18 [shape = 's32[1]{0}', space=sflag, size = 0x4, scoped, tag = 'scoped memory for tpu_custom_call.1']
    #allocation19 [shape = 'u8[65536]{0}', space=vmem, size = 0x10000, scoped, tag = 'input window, operand 15, single buffered']
    #allocation20 [shape = 'u8[524288]{0}', space=vmem, size = 0x80000, scoped, tag = 'input window, operand 17, single buffered']
    #allocation21 [shape = 's32[1]{0}', space=sflag, size = 0x4, scoped, tag = 'scoped memory for tpu_custom_call.1']
    #allocation22 [shape = 'u8[32768]{0}', space=vmem, size = 0x8000, scoped, tag = 'output window, operand 0, single buffered']
    %24 = vsyncpa [#allocation3], 0
    %25 = vsyncpa [#allocation6], 0
    %26 = vsyncpa [#allocation9], 0
    %27 = vsyncpa [#allocation12], 0
    %28 = vsyncpa [#allocation15], 0
    %29 = vsyncpa [#allocation18], 0
    %30 = vsyncpa [#allocation21], 0
    %31 = vsyncpa [#allocation4], 0
    // Predicated region
    $region2: #{tpu_custom_call.1} parent=1 // pred_check
      _
    $region3: #{tpu_custom_call.1} parent=1 // pred_check_branch
      %33 = sbr.rel (0) target = $region5
    $region4: #{tpu_custom_call.1} parent=1 // pred_region
      %s35 = ssub.s32 1024, 1024
      %36 = vsyncadd [#allocation3], %s35
      %s38 = sshll.u32 [#allocation2], 4
      %s39 = int_to_ptr.vmem [resolvable:$true] %s38
      %41 = dma.hbm_to_vmem [thread:$0]  %s0, 1024, %s39, [#allocation3]
    $region5: #{tpu_custom_call.1} parent=1 // pred_fallthru
      _
    // Predicated region
    $region6: #{tpu_custom_call.1} parent=1 // pred_check
      _
    $region7: #{tpu_custom_call.1} parent=1 // pred_check_branch
      %43 = sbr.rel (0) target = $region9
    $region8: #{tpu_custom_call.1} parent=1 // pred_region
      %s45 = ssub.s32 16384, 16384
      %46 = vsyncadd [#allocation6], %s45
      %s47 = sshll.u32 [#allocation5], 4
      %s48 = int_to_ptr.vmem [resolvable:$true] %s47
      %53 = dma.hbm_to_vmem [thread:$0]  %s1, 16384, %s48, [#allocation6], 128, 128, 8
    $region9: #{tpu_custom_call.1} parent=1 // pred_fallthru
      _
    // Predicated region
    $region10: #{tpu_custom_call.1} parent=1 // pred_check
      _
    $region11: #{tpu_custom_call.1} parent=1 // pred_check_branch
      %55 = sbr.rel (0) target = $region13
    $region12: #{tpu_custom_call.1} parent=1 // pred_region
      %s57 = ssub.s32 32, 32
      %58 = vsyncadd [#allocation6], %s57
      %s60 = sshll.u32 [#allocation7], 4
      %s61 = int_to_ptr.vmem [resolvable:$true] %s60
      %63 = dma.hbm_to_vmem [thread:$0]  %s2, 32, %s61, [#allocation6]
    $region13: #{tpu_custom_call.1} parent=1 // pred_fallthru
      _
    // Predicated region
    $region14: #{tpu_custom_call.1} parent=1 // pred_check
      _
    $region15: #{tpu_custom_call.1} parent=1 // pred_check_branch
      %65 = sbr.rel (0) target = $region17
    $region16: #{tpu_custom_call.1} parent=1 // pred_region
      _
    $region17: #{tpu_custom_call.1} parent=1 // pred_fallthru
      _
    // Predicated region
    $region18: #{tpu_custom_call.1} parent=1 // pred_check
      _
    $region19: #{tpu_custom_call.1} parent=1 // pred_check_branch
      %67 = sbr.rel (0) target = $region21
    $region20: #{tpu_custom_call.1} parent=1 // pred_region
      %s69 = ssub.s32 16, 16
      %70 = vsyncadd [#allocation9], %s69
      %s72 = sshll.u32 [#allocation8], 4
      %s73 = int_to_ptr.vmem [resolvable:$true] %s72
      %75 = dma.hbm_to_vmem [thread:$0]  %s4, 16, %s73, [#allocation9]
    $region21: #{tpu_custom_call.1} parent=1 // pred_fallthru
      _
    // Predicated region
    $region22: #{tpu_custom_call.1} parent=1 // pred_check
      _
    $region23: #{tpu_custom_call.1} parent=1 // pred_check_branch
      %77 = sbr.rel (0) target = $region25
    $region24: #{tpu_custom_call.1} parent=1 // pred_region
      _
    $region25: #{tpu_custom_call.1} parent=1 // pred_fallthru
      _
    // Predicated region
    $region26: #{tpu_custom_call.1} parent=1 // pred_check
      _
    $region27: #{tpu_custom_call.1} parent=1 // pred_check_branch
      %79 = sbr.rel (0) target = $region29
    $region28: #{tpu_custom_call.1} parent=1 // pred_region
      %s81 = ssub.s32 16, 16
      %82 = vsyncadd [#allocation9], %s81
      %s84 = sshll.u32 [#allocation10], 4
      %s85 = int_to_ptr.vmem [resolvable:$true] %s84
      %87 = dma.hbm_to_vmem [thread:$0]  %s6, 16, %s85, [#allocation9]
    $region29: #{tpu_custom_call.1} parent=1 // pred_fallthru
      _
    // Predicated region
    $region30: #{tpu_custom_call.1} parent=1 // pred_check
      _
    $region31: #{tpu_custom_call.1} parent=1 // pred_check_branch
      %89 = sbr.rel (0) target = $region33
    $region32: #{tpu_custom_call.1} parent=1 // pred_region
      _
    $region33: #{tpu_custom_call.1} parent=1 // pred_fallthru
      _
    // Predicated region
    $region34: #{tpu_custom_call.1} parent=1 // pred_check
      _
    $region35: #{tpu_custom_call.1} parent=1 // pred_check_branch
      %91 = sbr.rel (0) target = $region37
    $region36: #{tpu_custom_call.1} parent=1 // pred_region
      %s93 = ssub.s32 16, 16
      %94 = vsyncadd [#allocation12], %s93
      %s96 = sshll.u32 [#allocation11], 4
      %s97 = int_to_ptr.vmem [resolvable:$true] %s96
      %99 = dma.hbm_to_vmem [thread:$0]  %s8, 16, %s97, [#allocation12]
    $region37: #{tpu_custom_call.1} parent=1 // pred_fallthru
      _
    // Predicated region
    $region38: #{tpu_custom_call.1} parent=1 // pred_check
      _
    $region39: #{tpu_custom_call.1} parent=1 // pred_check_branch
      %101 = sbr.rel (0) target = $region41
    $region40: #{tpu_custom_call.1} parent=1 // pred_region
      %s103 = ssub.s32 256, 256
      %104 = vsyncadd [#allocation12], %s103
      %s105 = sshll.u32 [#allocation13], 4
      %s106 = int_to_ptr.vmem [resolvable:$true] %s105
      %111 = dma.hbm_to_vmem [thread:$0]  %s9, 256, %s106, [#allocation12], 64, 64, 4
    $region41: #{tpu_custom_call.1} parent=1 // pred_fallthru
      _
    // Predicated region
    $region42: #{tpu_custom_call.1} parent=1 // pred_check
      _
    $region43: #{tpu_custom_call.1} parent=1 // pred_check_branch
      %113 = sbr.rel (0) target = $region45
    $region44: #{tpu_custom_call.1} parent=1 // pred_region
      _
    $region45: #{tpu_custom_call.1} parent=1 // pred_fallthru
      _
    // Predicated region
    $region46: #{tpu_custom_call.1} parent=1 // pred_check
      _
    $region47: #{tpu_custom_call.1} parent=1 // pred_check_branch
      %115 = sbr.rel (0) target = $region49
    $region48: #{tpu_custom_call.1} parent=1 // pred_region
      %s117 = ssub.s32 256, 256
      %118 = vsyncadd [#allocation15], %s117
      %s119 = sshll.u32 [#allocation14], 4
      %s120 = int_to_ptr.vmem [resolvable:$true] %s119
      %125 = dma.hbm_to_vmem [thread:$0]  %s11, 256, %s120, [#allocation15], 64, 64, 4
    $region49: #{tpu_custom_call.1} parent=1 // pred_fallthru
      _
    // Predicated region
    $region50: #{tpu_custom_call.1} parent=1 // pred_check
      _
    $region51: #{tpu_custom_call.1} parent=1 // pred_check_branch
      %127 = sbr.rel (0) target = $region53
    $region52: #{tpu_custom_call.1} parent=1 // pred_region
      %s129 = ssub.s32 16, 16
      %130 = vsyncadd [#allocation15], %s129
      %s132 = sshll.u32 [#allocation16], 4
      %s133 = int_to_ptr.vmem [resolvable:$true] %s132
      %135 = dma.hbm_to_vmem [thread:$0]  %s12, 16, %s133, [#allocation15]
    $region53: #{tpu_custom_call.1} parent=1 // pred_fallthru
      _
    // Predicated region
    $region54: #{tpu_custom_call.1} parent=1 // pred_check
      _
    $region55: #{tpu_custom_call.1} parent=1 // pred_check_branch
      %137 = sbr.rel (0) target = $region57
    $region56: #{tpu_custom_call.1} parent=1 // pred_region
      _
    $region57: #{tpu_custom_call.1} parent=1 // pred_fallthru
      _
    // Predicated region
    $region58: #{tpu_custom_call.1} parent=1 // pred_check
      _
    $region59: #{tpu_custom_call.1} parent=1 // pred_check_branch
      %139 = sbr.rel (0) target = $region61
    $region60: #{tpu_custom_call.1} parent=1 // pred_region
      %s141 = ssub.s32 16, 16
      %142 = vsyncadd [#allocation18], %s141
      %s144 = sshll.u32 [#allocation17], 4
      %s145 = int_to_ptr.vmem [resolvable:$true] %s144
      %147 = dma.hbm_to_vmem [thread:$0]  %s14, 16, %s145, [#allocation18]
    $region61: #{tpu_custom_call.1} parent=1 // pred_fallthru
      _
    // Predicated region
    $region62: #{tpu_custom_call.1} parent=1 // pred_check
      _
    $region63: #{tpu_custom_call.1} parent=1 // pred_check_branch
      %149 = sbr.rel (0) target = $region65
    $region64: #{tpu_custom_call.1} parent=1 // pred_region
      %s151 = ssub.s32 2048, 2048
      %152 = vsyncadd [#allocation18], %s151
      %s153 = sshll.u32 [#allocation19], 4
      %s154 = int_to_ptr.vmem [resolvable:$true] %s153
      %159 = dma.hbm_to_vmem [thread:$0]  %s15, 2048, %s154, [#allocation18], 128, 128, 8
    $region65: #{tpu_custom_call.1} parent=1 // pred_fallthru
      _
    // Predicated region
    $region66: #{tpu_custom_call.1} parent=1 // pred_check
      _
    $region67: #{tpu_custom_call.1} parent=1 // pred_check_branch
      %161 = sbr.rel (0) target = $region69
    $region68: #{tpu_custom_call.1} parent=1 // pred_region
      _
    $region69: #{tpu_custom_call.1} parent=1 // pred_fallthru
      _
    // Predicated region
    $region70: #{tpu_custom_call.1} parent=1 // pred_check
      _
    $region71: #{tpu_custom_call.1} parent=1 // pred_check_branch
      %163 = sbr.rel (0) target = $region73
    $region72: #{tpu_custom_call.1} parent=1 // pred_region
      %s165 = ssub.s32 16384, 16384
      %166 = vsyncadd [#allocation21], %s165
      %s167 = sshll.u32 [#allocation20], 4
      %s168 = int_to_ptr.vmem [resolvable:$true] %s167
      %173 = dma.hbm_to_vmem [thread:$0]  %s17, 16384, %s168, [#allocation21], 512, 512, 32
    $region73: #{tpu_custom_call.1} parent=1 // pred_fallthru
      _
    // Predicated region
    $region74: #{tpu_custom_call.1} parent=1 // pred_check
      _
    $region75: #{tpu_custom_call.1} parent=1 // pred_check_branch
      %175 = sbr.rel (0) target = $region77
    $region76: #{tpu_custom_call.1} parent=1 // pred_region
      _
    $region77: #{tpu_custom_call.1} parent=1 // pred_fallthru
      _
    // Predicated region
    $region78: #{tpu_custom_call.1} parent=1 // pred_check
      _
    $region79: #{tpu_custom_call.1} parent=1 // pred_check_branch
      %177 = sbr.rel (0) target = $region81
    $region80: #{tpu_custom_call.1} parent=1 // pred_region
      %178 = dma.done [#allocation3], 1024
    $region81: #{tpu_custom_call.1} parent=1 // pred_fallthru
      _
    // Predicated region
    $region82: #{tpu_custom_call.1} parent=1 // pred_check
      _
    $region83: #{tpu_custom_call.1} parent=1 // pred_check_branch
      %180 = sbr.rel (0) target = $region85
    $region84: #{tpu_custom_call.1} parent=1 // pred_region
      %181 = dma.done [#allocation6], 16384
    $region85: #{tpu_custom_call.1} parent=1 // pred_fallthru
      _
    // Predicated region
    $region86: #{tpu_custom_call.1} parent=1 // pred_check
      _
    $region87: #{tpu_custom_call.1} parent=1 // pred_check_branch
      %183 = sbr.rel (0) target = $region89
    $region88: #{tpu_custom_call.1} parent=1 // pred_region
      %184 = dma.done [#allocation6], 32
    $region89: #{tpu_custom_call.1} parent=1 // pred_fallthru
      _
    // Predicated region
    $region90: #{tpu_custom_call.1} parent=1 // pred_check
      _
    $region91: #{tpu_custom_call.1} parent=1 // pred_check_branch
      %186 = sbr.rel (0) target = $region93
    $region92: #{tpu_custom_call.1} parent=1 // pred_region
      %187 = dma.done [#allocation9], 16
    $region93: #{tpu_custom_call.1} parent=1 // pred_fallthru
      _
    // Predicated region
    $region94: #{tpu_custom_call.1} parent=1 // pred_check
      _
    $region95: #{tpu_custom_call.1} parent=1 // pred_check_branch
      %189 = sbr.rel (0) target = $region97
    $region96: #{tpu_custom_call.1} parent=1 // pred_region
      %190 = dma.done [#allocation9], 16
    $region97: #{tpu_custom_call.1} parent=1 // pred_fallthru
      _
    // Predicated region
    $region98: #{tpu_custom_call.1} parent=1 // pred_check
      _
    $region99: #{tpu_custom_call.1} parent=1 // pred_check_branch
      %192 = sbr.rel (0) target = $region101
    $region100: #{tpu_custom_call.1} parent=1 // pred_region
      %193 = dma.done [#allocation12], 16
    $region101: #{tpu_custom_call.1} parent=1 // pred_fallthru
      _
    // Predicated region
    $region102: #{tpu_custom_call.1} parent=1 // pred_check
      _
    $region103: #{tpu_custom_call.1} parent=1 // pred_check_branch
      %195 = sbr.rel (0) target = $region105
    $region104: #{tpu_custom_call.1} parent=1 // pred_region
      %196 = dma.done [#allocation12], 256
    $region105: #{tpu_custom_call.1} parent=1 // pred_fallthru
      _
    // Predicated region
    $region106: #{tpu_custom_call.1} parent=1 // pred_check
      _
    $region107: #{tpu_custom_call.1} parent=1 // pred_check_branch
      %198 = sbr.rel (0) target = $region109
    $region108: #{tpu_custom_call.1} parent=1 // pred_region
      %199 = dma.done [#allocation15], 256
    $region109: #{tpu_custom_call.1} parent=1 // pred_fallthru
      _
    // Predicated region
    $region110: #{tpu_custom_call.1} parent=1 // pred_check
      _
    $region111: #{tpu_custom_call.1} parent=1 // pred_check_branch
      %201 = sbr.rel (0) target = $region113
    $region112: #{tpu_custom_call.1} parent=1 // pred_region
      %202 = dma.done [#allocation15], 16
    $region113: #{tpu_custom_call.1} parent=1 // pred_fallthru
      _
    // Predicated region
    $region114: #{tpu_custom_call.1} parent=1 // pred_check
      _
    $region115: #{tpu_custom_call.1} parent=1 // pred_check_branch
      %204 = sbr.rel (0) target = $region117
    $region116: #{tpu_custom_call.1} parent=1 // pred_region
      %205 = dma.done [#allocation18], 16
    $region117: #{tpu_custom_call.1} parent=1 // pred_fallthru
      _
    // Predicated region
    $region118: #{tpu_custom_call.1} parent=1 // pred_check
      _
    $region119: #{tpu_custom_call.1} parent=1 // pred_check_branch
      %207 = sbr.rel (0) target = $region121
    $region120: #{tpu_custom_call.1} parent=1 // pred_region
      %208 = dma.done [#allocation18], 2048
    $region121: #{tpu_custom_call.1} parent=1 // pred_fallthru
      _
    // Predicated region
    $region122: #{tpu_custom_call.1} parent=1 // pred_check
      _
    $region123: #{tpu_custom_call.1} parent=1 // pred_check_branch
      %210 = sbr.rel (0) target = $region125
    $region124: #{tpu_custom_call.1} parent=1 // pred_region
      %211 = dma.done [#allocation21], 16384
    $region125: #{tpu_custom_call.1} parent=1 // pred_fallthru
      _
    %v213 = vld [vmem:[#allocation2] sm:$0xff]
    %v214 = vld [vmem:[#allocation2 + $0x8] sm:$0xff]
    %v215 = vld [vmem:[#allocation2 + $0x10] sm:$0xff]
    %v216 = vld [vmem:[#allocation2 + $0x18] sm:$0xff]
    %v217 = vld [vmem:[#allocation2 + $0x20] sm:$0xff]
    %v218 = vld [vmem:[#allocation2 + $0x28] sm:$0xff]
    %v219 = vld [vmem:[#allocation2 + $0x30] sm:$0xff]
    %v220 = vld [vmem:[#allocation2 + $0x38] sm:$0xff]
    %v221 = vld [vmem:[#allocation5] sm:$0xff]
    %v222 = vld [vmem:[#allocation5 + $0x8] sm:$0xff]
    %v223 = vld [vmem:[#allocation5 + $0x10] sm:$0xff]
    %v224 = vld [vmem:[#allocation5 + $0x18] sm:$0xff]
    %v225 = vld [vmem:[#allocation5 + $0x20] sm:$0xff]
    %v226 = vld [vmem:[#allocation5 + $0x28] sm:$0xff]
    %v227 = vld [vmem:[#allocation5 + $0x30] sm:$0xff]
    %v228 = vld [vmem:[#allocation5 + $0x38] sm:$0xff]
    %v229 = vld [vmem:[#allocation5 + $0x40] sm:$0xff]
    %v230 = vld [vmem:[#allocation5 + $0x48] sm:$0xff]
    %v231 = vld [vmem:[#allocation5 + $0x50] sm:$0xff]
    %v232 = vld [vmem:[#allocation5 + $0x58] sm:$0xff]
    %v233 = vld [vmem:[#allocation5 + $0x60] sm:$0xff]
    %v234 = vld [vmem:[#allocation5 + $0x68] sm:$0xff]
    %v235 = vld [vmem:[#allocation5 + $0x70] sm:$0xff]
    %v236 = vld [vmem:[#allocation5 + $0x78] sm:$0xff]
    %v237 = vld [vmem:[#allocation5 + $0x80] sm:$0xff]
    %v238 = vld [vmem:[#allocation5 + $0x88] sm:$0xff]
    %v239 = vld [vmem:[#allocation5 + $0x90] sm:$0xff]
    %v240 = vld [vmem:[#allocation5 + $0x98] sm:$0xff]
    %v241 = vld [vmem:[#allocation5 + $0xa0] sm:$0xff]
    %v242 = vld [vmem:[#allocation5 + $0xa8] sm:$0xff]
    %v243 = vld [vmem:[#allocation5 + $0xb0] sm:$0xff]
    %v244 = vld [vmem:[#allocation5 + $0xb8] sm:$0xff]
    %v245 = vld [vmem:[#allocation5 + $0xc0] sm:$0xff]
    %v246 = vld [vmem:[#allocation5 + $0xc8] sm:$0xff]
    %v247 = vld [vmem:[#allocation5 + $0xd0] sm:$0xff]
    %v248 = vld [vmem:[#allocation5 + $0xd8] sm:$0xff]
    %v249 = vld [vmem:[#allocation5 + $0xe0] sm:$0xff]
    %v250 = vld [vmem:[#allocation5 + $0xe8] sm:$0xff]
    %v251 = vld [vmem:[#allocation5 + $0xf0] sm:$0xff]
    %v252 = vld [vmem:[#allocation5 + $0xf8] sm:$0xff]
    %v253 = vld [vmem:[#allocation5 + $0x100] sm:$0xff]
    %v254 = vld [vmem:[#allocation5 + $0x108] sm:$0xff]
    %v255 = vld [vmem:[#allocation5 + $0x110] sm:$0xff]
    %v256 = vld [vmem:[#allocation5 + $0x118] sm:$0xff]
    %v257 = vld [vmem:[#allocation5 + $0x120] sm:$0xff]
    %v258 = vld [vmem:[#allocation5 + $0x128] sm:$0xff]
    %v259 = vld [vmem:[#allocation5 + $0x130] sm:$0xff]
    %v260 = vld [vmem:[#allocation5 + $0x138] sm:$0xff]
    %v261 = vld [vmem:[#allocation5 + $0x140] sm:$0xff]
    %v262 = vld [vmem:[#allocation5 + $0x148] sm:$0xff]
    %v263 = vld [vmem:[#allocation5 + $0x150] sm:$0xff]
    %v264 = vld [vmem:[#allocation5 + $0x158] sm:$0xff]
    %v265 = vld [vmem:[#allocation5 + $0x160] sm:$0xff]
    %v266 = vld [vmem:[#allocation5 + $0x168] sm:$0xff]
    %v267 = vld [vmem:[#allocation5 + $0x170] sm:$0xff]
    %v268 = vld [vmem:[#allocation5 + $0x178] sm:$0xff]
    %v269 = vld [vmem:[#allocation5 + $0x180] sm:$0xff]
    %v270 = vld [vmem:[#allocation5 + $0x188] sm:$0xff]
    %v271 = vld [vmem:[#allocation5 + $0x190] sm:$0xff]
    %v272 = vld [vmem:[#allocation5 + $0x198] sm:$0xff]
    %v273 = vld [vmem:[#allocation5 + $0x1a0] sm:$0xff]
    %v274 = vld [vmem:[#allocation5 + $0x1a8] sm:$0xff]
    %v275 = vld [vmem:[#allocation5 + $0x1b0] sm:$0xff]
    %v276 = vld [vmem:[#allocation5 + $0x1b8] sm:$0xff]
    %v277 = vld [vmem:[#allocation5 + $0x1c0] sm:$0xff]
    %v278 = vld [vmem:[#allocation5 + $0x1c8] sm:$0xff]
    %v279 = vld [vmem:[#allocation5 + $0x1d0] sm:$0xff]
    %v280 = vld [vmem:[#allocation5 + $0x1d8] sm:$0xff]
    %v281 = vld [vmem:[#allocation5 + $0x1e0] sm:$0xff]
    %v282 = vld [vmem:[#allocation5 + $0x1e8] sm:$0xff]
    %v283 = vld [vmem:[#allocation5 + $0x1f0] sm:$0xff]
    %v284 = vld [vmem:[#allocation5 + $0x1f8] sm:$0xff]
    %v285 = vld [vmem:[#allocation5 + $0x200] sm:$0xff]
    %v286 = vld [vmem:[#allocation5 + $0x208] sm:$0xff]
    %v287 = vld [vmem:[#allocation5 + $0x210] sm:$0xff]
    %v288 = vld [vmem:[#allocation5 + $0x218] sm:$0xff]
    %v289 = vld [vmem:[#allocation5 + $0x220] sm:$0xff]
    %v290 = vld [vmem:[#allocation5 + $0x228] sm:$0xff]
    %v291 = vld [vmem:[#allocation5 + $0x230] sm:$0xff]
    %v292 = vld [vmem:[#allocation5 + $0x238] sm:$0xff]
    %v293 = vld [vmem:[#allocation5 + $0x240] sm:$0xff]
    %v294 = vld [vmem:[#allocation5 + $0x248] sm:$0xff]
    %v295 = vld [vmem:[#allocation5 + $0x250] sm:$0xff]
    %v296 = vld [vmem:[#allocation5 + $0x258] sm:$0xff]
    %v297 = vld [vmem:[#allocation5 + $0x260] sm:$0xff]
    %v298 = vld [vmem:[#allocation5 + $0x268] sm:$0xff]
    %v299 = vld [vmem:[#allocation5 + $0x270] sm:$0xff]
    %v300 = vld [vmem:[#allocation5 + $0x278] sm:$0xff]
    %v301 = vld [vmem:[#allocation5 + $0x280] sm:$0xff]
    %v302 = vld [vmem:[#allocation5 + $0x288] sm:$0xff]
    %v303 = vld [vmem:[#allocation5 + $0x290] sm:$0xff]
    %v304 = vld [vmem:[#allocation5 + $0x298] sm:$0xff]
    %v305 = vld [vmem:[#allocation5 + $0x2a0] sm:$0xff]
    %v306 = vld [vmem:[#allocation5 + $0x2a8] sm:$0xff]
    %v307 = vld [vmem:[#allocation5 + $0x2b0] sm:$0xff]
    %v308 = vld [vmem:[#allocation5 + $0x2b8] sm:$0xff]
    %v309 = vld [vmem:[#allocation5 + $0x2c0] sm:$0xff]
    %v310 = vld [vmem:[#allocation5 + $0x2c8] sm:$0xff]
    %v311 = vld [vmem:[#allocation5 + $0x2d0] sm:$0xff]
    %v312 = vld [vmem:[#allocation5 + $0x2d8] sm:$0xff]
    %v313 = vld [vmem:[#allocation5 + $0x2e0] sm:$0xff]
    %v314 = vld [vmem:[#allocation5 + $0x2e8] sm:$0xff]
    %v315 = vld [vmem:[#allocation5 + $0x2f0] sm:$0xff]
    %v316 = vld [vmem:[#allocation5 + $0x2f8] sm:$0xff]
    %v317 = vld [vmem:[#allocation5 + $0x300] sm:$0xff]
    %v318 = vld [vmem:[#allocation5 + $0x308] sm:$0xff]
    %v319 = vld [vmem:[#allocation5 + $0x310] sm:$0xff]
    %v320 = vld [vmem:[#allocation5 + $0x318] sm:$0xff]
    %v321 = vld [vmem:[#allocation5 + $0x320] sm:$0xff]
    %v322 = vld [vmem:[#allocation5 + $0x328] sm:$0xff]
    %v323 = vld [vmem:[#allocation5 + $0x330] sm:$0xff]
    %v324 = vld [vmem:[#allocation5 + $0x338] sm:$0xff]
    %v325 = vld [vmem:[#allocation5 + $0x340] sm:$0xff]
    %v326 = vld [vmem:[#allocation5 + $0x348] sm:$0xff]
    %v327 = vld [vmem:[#allocation5 + $0x350] sm:$0xff]
    %v328 = vld [vmem:[#allocation5 + $0x358] sm:$0xff]
    %v329 = vld [vmem:[#allocation5 + $0x360] sm:$0xff]
    %v330 = vld [vmem:[#allocation5 + $0x368] sm:$0xff]
    %v331 = vld [vmem:[#allocation5 + $0x370] sm:$0xff]
    %v332 = vld [vmem:[#allocation5 + $0x378] sm:$0xff]
    %v333 = vld [vmem:[#allocation5 + $0x380] sm:$0xff]
    %v334 = vld [vmem:[#allocation5 + $0x388] sm:$0xff]
    %v335 = vld [vmem:[#allocation5 + $0x390] sm:$0xff]
    %v336 = vld [vmem:[#allocation5 + $0x398] sm:$0xff]
    %v337 = vld [vmem:[#allocation5 + $0x3a0] sm:$0xff]
    %v338 = vld [vmem:[#allocation5 + $0x3a8] sm:$0xff]
    %v339 = vld [vmem:[#allocation5 + $0x3b0] sm:$0xff]
    %v340 = vld [vmem:[#allocation5 + $0x3b8] sm:$0xff]
    %v341 = vld [vmem:[#allocation5 + $0x3c0] sm:$0xff]
    %v342 = vld [vmem:[#allocation5 + $0x3c8] sm:$0xff]
    %v343 = vld [vmem:[#allocation5 + $0x3d0] sm:$0xff]
    %v344 = vld [vmem:[#allocation5 + $0x3d8] sm:$0xff]
    %v345 = vld [vmem:[#allocation5 + $0x3e0] sm:$0xff]
    %v346 = vld [vmem:[#allocation5 + $0x3e8] sm:$0xff]
    %v347 = vld [vmem:[#allocation5 + $0x3f0] sm:$0xff]
    %v348 = vld [vmem:[#allocation5 + $0x3f8] sm:$0xff]
    %v349 = vld [vmem:[#allocation7] sm:$0x3]
    %v350 = vpack.c.bf16 %v213, %v213
    %v351 = vpack.c.bf16 %v214, %v214
    %v352 = vpack.c.bf16 %v215, %v215
    %v353 = vpack.c.bf16 %v216, %v216
    %v354 = vpack.c.bf16 %v217, %v217
    %v355 = vpack.c.bf16 %v218, %v218
    %v356 = vpack.c.bf16 %v219, %v219
    %v357 = vpack.c.bf16 %v220, %v220
    %v359 = vlaneseq
    %v360 = vshrl.u32 %v359, 7
    %v361 = vsub.s32 0, %v360
    %v362 = vrot.slane %v349, %v361
    %v363 = vlaneseq
    %v364 = vshrl.u32 %v363, 7
    %v365 = vsub.s32 1, %v364
    %v366 = vrot.slane %v349, %v365
    %v497 = vunpack.c.l.b16 %v221
    %v498 = vunpack.c.h.b16 %v221
    %v499 = vunpack.c.l.b16 %v222
    %v500 = vunpack.c.h.b16 %v222
    %v501 = vunpack.c.l.b16 %v223
    %v502 = vunpack.c.h.b16 %v223
    %v503 = vunpack.c.l.b16 %v224
    %v504 = vunpack.c.h.b16 %v224
    %v505 = vunpack.c.l.b16 %v225
    %v506 = vunpack.c.h.b16 %v225
    %v507 = vunpack.c.l.b16 %v226
    %v508 = vunpack.c.h.b16 %v226
    %v509 = vunpack.c.l.b16 %v227
    %v510 = vunpack.c.h.b16 %v227
    %v511 = vunpack.c.l.b16 %v228
    %v512 = vunpack.c.h.b16 %v228
    %v513 = vunpack.c.l.b16 %v229
    %v514 = vunpack.c.h.b16 %v229
    %v515 = vunpack.c.l.b16 %v230
    %v516 = vunpack.c.h.b16 %v230
    %v517 = vunpack.c.l.b16 %v231
    %v518 = vunpack.c.h.b16 %v231
    %v519 = vunpack.c.l.b16 %v232
    %v520 = vunpack.c.h.b16 %v232
    %v521 = vunpack.c.l.b16 %v233
    %v522 = vunpack.c.h.b16 %v233
    %v523 = vunpack.c.l.b16 %v234
    %v524 = vunpack.c.h.b16 %v234
    %v525 = vunpack.c.l.b16 %v235
    %v526 = vunpack.c.h.b16 %v235
    %v527 = vunpack.c.l.b16 %v236
    %v528 = vunpack.c.h.b16 %v236
    %v529 = vunpack.c.l.b16 %v237
    %v530 = vunpack.c.h.b16 %v237
    %v531 = vunpack.c.l.b16 %v238
    %v532 = vunpack.c.h.b16 %v238
    %v533 = vunpack.c.l.b16 %v239
    %v534 = vunpack.c.h.b16 %v239
    %v535 = vunpack.c.l.b16 %v240
    %v536 = vunpack.c.h.b16 %v240
    %v537 = vunpack.c.l.b16 %v241
    %v538 = vunpack.c.h.b16 %v241
    %v539 = vunpack.c.l.b16 %v242
    %v540 = vunpack.c.h.b16 %v242
    %v541 = vunpack.c.l.b16 %v243
    %v542 = vunpack.c.h.b16 %v243
    %v543 = vunpack.c.l.b16 %v244
    %v544 = vunpack.c.h.b16 %v244
    %v545 = vunpack.c.l.b16 %v245
    %v546 = vunpack.c.h.b16 %v245
    %v547 = vunpack.c.l.b16 %v246
    %v548 = vunpack.c.h.b16 %v246
    %v549 = vunpack.c.l.b16 %v247
    %v550 = vunpack.c.h.b16 %v247
    %v551 = vunpack.c.l.b16 %v248
    %v552 = vunpack.c.h.b16 %v248
    %v553 = vunpack.c.l.b16 %v249
    %v554 = vunpack.c.h.b16 %v249
    %v555 = vunpack.c.l.b16 %v250
    %v556 = vunpack.c.h.b16 %v250
    %v557 = vunpack.c.l.b16 %v251
    %v558 = vunpack.c.h.b16 %v251
    %v559 = vunpack.c.l.b16 %v252
    %v560 = vunpack.c.h.b16 %v252
    %v561 = vunpack.c.l.b16 %v253
    %v562 = vunpack.c.h.b16 %v253
    %v563 = vunpack.c.l.b16 %v254
    %v564 = vunpack.c.h.b16 %v254
    %v565 = vunpack.c.l.b16 %v255
    %v566 = vunpack.c.h.b16 %v255
    %v567 = vunpack.c.l.b16 %v256
    %v568 = vunpack.c.h.b16 %v256
    %v569 = vunpack.c.l.b16 %v257
    %v570 = vunpack.c.h.b16 %v257
    %v571 = vunpack.c.l.b16 %v258
    %v572 = vunpack.c.h.b16 %v258
    %v573 = vunpack.c.l.b16 %v259
    %v574 = vunpack.c.h.b16 %v259
    %v575 = vunpack.c.l.b16 %v260
    %v576 = vunpack.c.h.b16 %v260
    %v577 = vunpack.c.l.b16 %v261
    %v578 = vunpack.c.h.b16 %v261
    %v579 = vunpack.c.l.b16 %v262
    %v580 = vunpack.c.h.b16 %v262
    %v581 = vunpack.c.l.b16 %v263
    %v582 = vunpack.c.h.b16 %v263
    %v583 = vunpack.c.l.b16 %v264
    %v584 = vunpack.c.h.b16 %v264
    %v585 = vunpack.c.l.b16 %v265
    %v586 = vunpack.c.h.b16 %v265
    %v587 = vunpack.c.l.b16 %v266
    %v588 = vunpack.c.h.b16 %v266
    %v589 = vunpack.c.l.b16 %v267
    %v590 = vunpack.c.h.b16 %v267
    %v591 = vunpack.c.l.b16 %v268
    %v592 = vunpack.c.h.b16 %v268
    %v593 = vunpack.c.l.b16 %v269
    %v594 = vunpack.c.h.b16 %v269
    %v595 = vunpack.c.l.b16 %v270
    %v596 = vunpack.c.h.b16 %v270
    %v597 = vunpack.c.l.b16 %v271
    %v598 = vunpack.c.h.b16 %v271
    %v599 = vunpack.c.l.b16 %v272
    %v600 = vunpack.c.h.b16 %v272
    %v601 = vunpack.c.l.b16 %v273
    %v602 = vunpack.c.h.b16 %v273
    %v603 = vunpack.c.l.b16 %v274
    %v604 = vunpack.c.h.b16 %v274
    %v605 = vunpack.c.l.b16 %v275
    %v606 = vunpack.c.h.b16 %v275
    %v607 = vunpack.c.l.b16 %v276
    %v608 = vunpack.c.h.b16 %v276
    %v609 = vunpack.c.l.b16 %v277
    %v610 = vunpack.c.h.b16 %v277
    %v611 = vunpack.c.l.b16 %v278
    %v612 = vunpack.c.h.b16 %v278
    %v613 = vunpack.c.l.b16 %v279
    %v614 = vunpack.c.h.b16 %v279
    %v615 = vunpack.c.l.b16 %v280
    %v616 = vunpack.c.h.b16 %v280
    %v617 = vunpack.c.l.b16 %v281
    %v618 = vunpack.c.h.b16 %v281
    %v619 = vunpack.c.l.b16 %v282
    %v620 = vunpack.c.h.b16 %v282
    %v621 = vunpack.c.l.b16 %v283
    %v622 = vunpack.c.h.b16 %v283
    %v623 = vunpack.c.l.b16 %v284
    %v624 = vunpack.c.h.b16 %v284
    %v625 = vunpack.c.l.b16 %v285
    %v626 = vunpack.c.h.b16 %v285
    %v627 = vunpack.c.l.b16 %v286
    %v628 = vunpack.c.h.b16 %v286
    %v629 = vunpack.c.l.b16 %v287
    %v630 = vunpack.c.h.b16 %v287
    %v631 = vunpack.c.l.b16 %v288
    %v632 = vunpack.c.h.b16 %v288
    %v633 = vunpack.c.l.b16 %v289
    %v634 = vunpack.c.h.b16 %v289
    %v635 = vunpack.c.l.b16 %v290
    %v636 = vunpack.c.h.b16 %v290
    %v637 = vunpack.c.l.b16 %v291
    %v638 = vunpack.c.h.b16 %v291
    %v639 = vunpack.c.l.b16 %v292
    %v640 = vunpack.c.h.b16 %v292
    %v641 = vunpack.c.l.b16 %v293
    %v642 = vunpack.c.h.b16 %v293
    %v643 = vunpack.c.l.b16 %v294
    %v644 = vunpack.c.h.b16 %v294
    %v645 = vunpack.c.l.b16 %v295
    %v646 = vunpack.c.h.b16 %v295
    %v647 = vunpack.c.l.b16 %v296
    %v648 = vunpack.c.h.b16 %v296
    %v649 = vunpack.c.l.b16 %v297
    %v650 = vunpack.c.h.b16 %v297
    %v651 = vunpack.c.l.b16 %v298
    %v652 = vunpack.c.h.b16 %v298
    %v653 = vunpack.c.l.b16 %v299
    %v654 = vunpack.c.h.b16 %v299
    %v655 = vunpack.c.l.b16 %v300
    %v656 = vunpack.c.h.b16 %v300
    %v657 = vunpack.c.l.b16 %v301
    %v658 = vunpack.c.h.b16 %v301
    %v659 = vunpack.c.l.b16 %v302
    %v660 = vunpack.c.h.b16 %v302
    %v661 = vunpack.c.l.b16 %v303
    %v662 = vunpack.c.h.b16 %v303
    %v663 = vunpack.c.l.b16 %v304
    %v664 = vunpack.c.h.b16 %v304
    %v665 = vunpack.c.l.b16 %v305
    %v666 = vunpack.c.h.b16 %v305
    %v667 = vunpack.c.l.b16 %v306
    %v668 = vunpack.c.h.b16 %v306
    %v669 = vunpack.c.l.b16 %v307
    %v670 = vunpack.c.h.b16 %v307
    %v671 = vunpack.c.l.b16 %v308
    %v672 = vunpack.c.h.b16 %v308
    %v673 = vunpack.c.l.b16 %v309
    %v674 = vunpack.c.h.b16 %v309
    %v675 = vunpack.c.l.b16 %v310
    %v676 = vunpack.c.h.b16 %v310
    %v677 = vunpack.c.l.b16 %v311
    %v678 = vunpack.c.h.b16 %v311
    %v679 = vunpack.c.l.b16 %v312
    %v680 = vunpack.c.h.b16 %v312
    %v681 = vunpack.c.l.b16 %v313
    %v682 = vunpack.c.h.b16 %v313
    %v683 = vunpack.c.l.b16 %v314
    %v684 = vunpack.c.h.b16 %v314
    %v685 = vunpack.c.l.b16 %v315
    %v686 = vunpack.c.h.b16 %v315
    %v687 = vunpack.c.l.b16 %v316
    %v688 = vunpack.c.h.b16 %v316
    %v689 = vunpack.c.l.b16 %v317
    %v690 = vunpack.c.h.b16 %v317
    %v691 = vunpack.c.l.b16 %v318
    %v692 = vunpack.c.h.b16 %v318
    %v693 = vunpack.c.l.b16 %v319
    %v694 = vunpack.c.h.b16 %v319
    %v695 = vunpack.c.l.b16 %v320
    %v696 = vunpack.c.h.b16 %v320
    %v697 = vunpack.c.l.b16 %v321
    %v698 = vunpack.c.h.b16 %v321
    %v699 = vunpack.c.l.b16 %v322
    %v700 = vunpack.c.h.b16 %v322
    %v701 = vunpack.c.l.b16 %v323
    %v702 = vunpack.c.h.b16 %v323
    %v703 = vunpack.c.l.b16 %v324
    %v704 = vunpack.c.h.b16 %v324
    %v705 = vunpack.c.l.b16 %v325
    %v706 = vunpack.c.h.b16 %v325
    %v707 = vunpack.c.l.b16 %v326
    %v708 = vunpack.c.h.b16 %v326
    %v709 = vunpack.c.l.b16 %v327
    %v710 = vunpack.c.h.b16 %v327
    %v711 = vunpack.c.l.b16 %v328
    %v712 = vunpack.c.h.b16 %v328
    %v713 = vunpack.c.l.b16 %v329
    %v714 = vunpack.c.h.b16 %v329
    %v715 = vunpack.c.l.b16 %v330
    %v716 = vunpack.c.h.b16 %v330
    %v717 = vunpack.c.l.b16 %v331
    %v718 = vunpack.c.h.b16 %v331
    %v719 = vunpack.c.l.b16 %v332
    %v720 = vunpack.c.h.b16 %v332
    %v721 = vunpack.c.l.b16 %v333
    %v722 = vunpack.c.h.b16 %v333
    %v723 = vunpack.c.l.b16 %v334
    %v724 = vunpack.c.h.b16 %v334
    %v725 = vunpack.c.l.b16 %v335
    %v726 = vunpack.c.h.b16 %v335
    %v727 = vunpack.c.l.b16 %v336
    %v728 = vunpack.c.h.b16 %v336
    %v729 = vunpack.c.l.b16 %v337
    %v730 = vunpack.c.h.b16 %v337
    %v731 = vunpack.c.l.b16 %v338
    %v732 = vunpack.c.h.b16 %v338
    %v733 = vunpack.c.l.b16 %v339
    %v734 = vunpack.c.h.b16 %v339
    %v735 = vunpack.c.l.b16 %v340
    %v736 = vunpack.c.h.b16 %v340
    %v737 = vunpack.c.l.b16 %v341
    %v738 = vunpack.c.h.b16 %v341
    %v739 = vunpack.c.l.b16 %v342
    %v740 = vunpack.c.h.b16 %v342
    %v741 = vunpack.c.l.b16 %v343
    %v742 = vunpack.c.h.b16 %v343
    %v743 = vunpack.c.l.b16 %v344
    %v744 = vunpack.c.h.b16 %v344
    %v745 = vunpack.c.l.b16 %v345
    %v746 = vunpack.c.h.b16 %v345
    %v747 = vunpack.c.l.b16 %v346
    %v748 = vunpack.c.h.b16 %v346
    %v749 = vunpack.c.l.b16 %v347
    %v750 = vunpack.c.h.b16 %v347
    %v751 = vunpack.c.l.b16 %v348
    %v752 = vunpack.c.h.b16 %v348
    %v753 = vpack.c.b16 %v499, %v497
    %v754 = vpack.c.b16 %v500, %v498
    %v755 = vpack.c.b16 %v503, %v501
    %v756 = vpack.c.b16 %v504, %v502
    %v757 = vpack.c.b16 %v507, %v505
    %v758 = vpack.c.b16 %v508, %v506
    %v759 = vpack.c.b16 %v511, %v509
    %v760 = vpack.c.b16 %v512, %v510
    %v761 = vpack.c.b16 %v515, %v513
    %v762 = vpack.c.b16 %v516, %v514
    %v763 = vpack.c.b16 %v519, %v517
    %v764 = vpack.c.b16 %v520, %v518
    %v765 = vpack.c.b16 %v523, %v521
    %v766 = vpack.c.b16 %v524, %v522
    %v767 = vpack.c.b16 %v527, %v525
    %v768 = vpack.c.b16 %v528, %v526
    %v769 = vpack.c.b16 %v531, %v529
    %v770 = vpack.c.b16 %v532, %v530
    %v771 = vpack.c.b16 %v535, %v533
    %v772 = vpack.c.b16 %v536, %v534
    %v773 = vpack.c.b16 %v539, %v537
    %v774 = vpack.c.b16 %v540, %v538
    %v775 = vpack.c.b16 %v543, %v541
    %v776 = vpack.c.b16 %v544, %v542
    %v777 = vpack.c.b16 %v547, %v545
    %v778 = vpack.c.b16 %v548, %v546
    %v779 = vpack.c.b16 %v551, %v549
    %v780 = vpack.c.b16 %v552, %v550
    %v781 = vpack.c.b16 %v555, %v553
    %v782 = vpack.c.b16 %v556, %v554
    %v783 = vpack.c.b16 %v559, %v557
    %v784 = vpack.c.b16 %v560, %v558
    %v785 = vpack.c.b16 %v563, %v561
    %v786 = vpack.c.b16 %v564, %v562
    %v787 = vpack.c.b16 %v567, %v565
    %v788 = vpack.c.b16 %v568, %v566
    %v789 = vpack.c.b16 %v571, %v569
    %v790 = vpack.c.b16 %v572, %v570
    %v791 = vpack.c.b16 %v575, %v573
    %v792 = vpack.c.b16 %v576, %v574
    %v793 = vpack.c.b16 %v579, %v577
    %v794 = vpack.c.b16 %v580, %v578
    %v795 = vpack.c.b16 %v583, %v581
    %v796 = vpack.c.b16 %v584, %v582
    %v797 = vpack.c.b16 %v587, %v585
    %v798 = vpack.c.b16 %v588, %v586
    %v799 = vpack.c.b16 %v591, %v589
    %v800 = vpack.c.b16 %v592, %v590
    %v801 = vpack.c.b16 %v595, %v593
    %v802 = vpack.c.b16 %v596, %v594
    %v803 = vpack.c.b16 %v599, %v597
    %v804 = vpack.c.b16 %v600, %v598
    %v805 = vpack.c.b16 %v603, %v601
    %v806 = vpack.c.b16 %v604, %v602
    %v807 = vpack.c.b16 %v607, %v605
    %v808 = vpack.c.b16 %v608, %v606
    %v809 = vpack.c.b16 %v611, %v609
    %v810 = vpack.c.b16 %v612, %v610
    %v811 = vpack.c.b16 %v615, %v613
    %v812 = vpack.c.b16 %v616, %v614
    %v813 = vpack.c.b16 %v619, %v617
    %v814 = vpack.c.b16 %v620, %v618
    %v815 = vpack.c.b16 %v623, %v621
    %v816 = vpack.c.b16 %v624, %v622
    %v817 = vpack.c.b16 %v627, %v625
    %v818 = vpack.c.b16 %v628, %v626
    %v819 = vpack.c.b16 %v631, %v629
    %v820 = vpack.c.b16 %v632, %v630
    %v821 = vpack.c.b16 %v635, %v633
    %v822 = vpack.c.b16 %v636, %v634
    %v823 = vpack.c.b16 %v639, %v637
    %v824 = vpack.c.b16 %v640, %v638
    %v825 = vpack.c.b16 %v643, %v641
    %v826 = vpack.c.b16 %v644, %v642
    %v827 = vpack.c.b16 %v647, %v645
    %v828 = vpack.c.b16 %v648, %v646
    %v829 = vpack.c.b16 %v651, %v649
    %v830 = vpack.c.b16 %v652, %v650
    %v831 = vpack.c.b16 %v655, %v653
    %v832 = vpack.c.b16 %v656, %v654
    %v833 = vpack.c.b16 %v659, %v657
    %v834 = vpack.c.b16 %v660, %v658
    %v835 = vpack.c.b16 %v663, %v661
    %v836 = vpack.c.b16 %v664, %v662
    %v837 = vpack.c.b16 %v667, %v665
    %v838 = vpack.c.b16 %v668, %v666
    %v839 = vpack.c.b16 %v671, %v669
    %v840 = vpack.c.b16 %v672, %v670
    %v841 = vpack.c.b16 %v675, %v673
    %v842 = vpack.c.b16 %v676, %v674
    %v843 = vpack.c.b16 %v679, %v677
    %v844 = vpack.c.b16 %v680, %v678
    %v845 = vpack.c.b16 %v683, %v681
    %v846 = vpack.c.b16 %v684, %v682
    %v847 = vpack.c.b16 %v687, %v685
    %v848 = vpack.c.b16 %v688, %v686
    %v849 = vpack.c.b16 %v691, %v689
    %v850 = vpack.c.b16 %v692, %v690
    %v851 = vpack.c.b16 %v695, %v693
    %v852 = vpack.c.b16 %v696, %v694
    %v853 = vpack.c.b16 %v699, %v697
    %v854 = vpack.c.b16 %v700, %v698
    %v855 = vpack.c.b16 %v703, %v701
    %v856 = vpack.c.b16 %v704, %v702
    %v857 = vpack.c.b16 %v707, %v705
    %v858 = vpack.c.b16 %v708, %v706
    %v859 = vpack.c.b16 %v711, %v709
    %v860 = vpack.c.b16 %v712, %v710
    %v861 = vpack.c.b16 %v715, %v713
    %v862 = vpack.c.b16 %v716, %v714
    %v863 = vpack.c.b16 %v719, %v717
    %v864 = vpack.c.b16 %v720, %v718
    %v865 = vpack.c.b16 %v723, %v721
    %v866 = vpack.c.b16 %v724, %v722
    %v867 = vpack.c.b16 %v727, %v725
    %v868 = vpack.c.b16 %v728, %v726
    %v869 = vpack.c.b16 %v731, %v729
    %v870 = vpack.c.b16 %v732, %v730
    %v871 = vpack.c.b16 %v735, %v733
    %v872 = vpack.c.b16 %v736, %v734
    %v873 = vpack.c.b16 %v739, %v737
    %v874 = vpack.c.b16 %v740, %v738
    %v875 = vpack.c.b16 %v743, %v741
    %v876 = vpack.c.b16 %v744, %v742
    %v877 = vpack.c.b16 %v747, %v745
    %v878 = vpack.c.b16 %v748, %v746
    %v879 = vpack.c.b16 %v751, %v749
    %v880 = vpack.c.b16 %v752, %v750
    %1009 = vmatprep.subr.bf16.mxu0 %v768
    %1010 = vmatpush1.bf16.msra.mxu0 %v767
    %1011 = vmatprep.subr.bf16.mxu0 %v766
    %1012 = vmatpush1.bf16.msra.mxu0 %v765
    %1013 = vmatprep.subr.bf16.mxu0 %v764
    %1014 = vmatpush1.bf16.msra.mxu0 %v763
    %1015 = vmatprep.subr.bf16.mxu0 %v762
    %1016 = vmatpush1.bf16.msra.mxu0 %v761
    %1017 = vmatprep.subr.bf16.mxu0 %v760
    %1018 = vmatpush1.bf16.msra.mxu0 %v759
    %1019 = vmatprep.subr.bf16.mxu0 %v758
    %1020 = vmatpush1.bf16.msra.mxu0 %v757
    %1021 = vmatprep.subr.bf16.mxu0 %v756
    %1022 = vmatpush1.bf16.msra.mxu0 %v755
    %1023 = vmatprep.subr.bf16.mxu0 %v754
    %1024 = vmatpush1.bf16.msra.mxu0 %v753
    %1025 = vmatprep.subr.bf16.mxu0 %v784
    %1026 = vmatpush2.bf16.msra.mxu0 %v783
    %1027 = vmatprep.subr.bf16.mxu0 %v782
    %1028 = vmatpush2.bf16.msra.mxu0 %v781
    %1029 = vmatprep.subr.bf16.mxu0 %v780
    %1030 = vmatpush2.bf16.msra.mxu0 %v779
    %1031 = vmatprep.subr.bf16.mxu0 %v778
    %1032 = vmatpush2.bf16.msra.mxu0 %v777
    %1033 = vmatprep.subr.bf16.mxu0 %v776
    %1034 = vmatpush2.bf16.msra.mxu0 %v775
    %1035 = vmatprep.subr.bf16.mxu0 %v774
    %1036 = vmatpush2.bf16.msra.mxu0 %v773
    %1037 = vmatprep.subr.bf16.mxu0 %v772
    %1038 = vmatpush2.bf16.msra.mxu0 %v771
    %1039 = vmatprep.subr.bf16.mxu0 %v770
    %1040 = vmatpush2.bf16.msra.mxu0 %v769
    %1041 = vmatprep.mubr.bf16.mxu0 %v351
    %1042 = vmatmul.mubr.bf16.gmra.mxu0 %v350
    %v1043 = vpop.f32.mrf.mxu0
    %v1044 = vadd.f32 %v362, %v1043
    %v1045 = vpop.f32.mrf.mxu0
    %v1046 = vadd.f32 %v366, %v1045
    %v1047 = vpop.f32.mrf.mxu0
    %v1048 = vpop.f32.mrf.mxu0
    %1049 = vdwg.mxu0
    %1050 = vmatprep.subr.bf16.mxu0 %v800
    %1051 = vmatpush1.bf16.msra.mxu0 %v799
    %1052 = vmatprep.subr.bf16.mxu0 %v798
    %1053 = vmatpush1.bf16.msra.mxu0 %v797
    %1054 = vmatprep.subr.bf16.mxu0 %v796
    %1055 = vmatpush1.bf16.msra.mxu0 %v795
    %1056 = vmatprep.subr.bf16.mxu0 %v794
    %1057 = vmatpush1.bf16.msra.mxu0 %v793
    %1058 = vmatprep.subr.bf16.mxu0 %v792
    %1059 = vmatpush1.bf16.msra.mxu0 %v791
    %1060 = vmatprep.subr.bf16.mxu0 %v790
    %1061 = vmatpush1.bf16.msra.mxu0 %v789
    %1062 = vmatprep.subr.bf16.mxu0 %v788
    %1063 = vmatpush1.bf16.msra.mxu0 %v787
    %1064 = vmatprep.subr.bf16.mxu0 %v786
    %1065 = vmatpush1.bf16.msra.mxu0 %v785
    %1066 = vmatprep.subr.bf16.mxu0 %v816
    %1067 = vmatpush2.bf16.msra.mxu0 %v815
    %1068 = vmatprep.subr.bf16.mxu0 %v814
    %1069 = vmatpush2.bf16.msra.mxu0 %v813
    %1070 = vmatprep.subr.bf16.mxu0 %v812
    %1071 = vmatpush2.bf16.msra.mxu0 %v811
    %1072 = vmatprep.subr.bf16.mxu0 %v810
    %1073 = vmatpush2.bf16.msra.mxu0 %v809
    %1074 = vmatprep.subr.bf16.mxu0 %v808
    %1075 = vmatpush2.bf16.msra.mxu0 %v807
    %1076 = vmatprep.subr.bf16.mxu0 %v806
    %1077 = vmatpush2.bf16.msra.mxu0 %v805
    %1078 = vmatprep.subr.bf16.mxu0 %v804
    %1079 = vmatpush2.bf16.msra.mxu0 %v803
    %1080 = vmatprep.subr.bf16.mxu0 %v802
    %1081 = vmatpush2.bf16.msra.mxu0 %v801
    %1082 = vmatprep.mubr.bf16.mxu0 %v353
    %1083 = vmatmul.mubr.bf16.gmra.mxu0 %v352
    %v1084 = vpop.f32.mrf.mxu0
    %v1085 = vadd.f32 %v1044, %v1084
    %v1086 = vpop.f32.mrf.mxu0
    %v1087 = vadd.f32 %v1046, %v1086
    %v1088 = vpop.f32.mrf.mxu0
    %v1089 = vpop.f32.mrf.mxu0
    %1090 = vdwg.mxu0
    %1091 = vmatprep.subr.bf16.mxu0 %v832
    %1092 = vmatpush1.bf16.msra.mxu0 %v831
    %1093 = vmatprep.subr.bf16.mxu0 %v830
    %1094 = vmatpush1.bf16.msra.mxu0 %v829
    %1095 = vmatprep.subr.bf16.mxu0 %v828
    %1096 = vmatpush1.bf16.msra.mxu0 %v827
    %1097 = vmatprep.subr.bf16.mxu0 %v826
    %1098 = vmatpush1.bf16.msra.mxu0 %v825
    %1099 = vmatprep.subr.bf16.mxu0 %v824
    %1100 = vmatpush1.bf16.msra.mxu0 %v823
    %1101 = vmatprep.subr.bf16.mxu0 %v822
    %1102 = vmatpush1.bf16.msra.mxu0 %v821
    %1103 = vmatprep.subr.bf16.mxu0 %v820
    %1104 = vmatpush1.bf16.msra.mxu0 %v819
    %1105 = vmatprep.subr.bf16.mxu0 %v818
    %1106 = vmatpush1.bf16.msra.mxu0 %v817
    %1107 = vmatprep.subr.bf16.mxu0 %v848
    %1108 = vmatpush2.bf16.msra.mxu0 %v847
    %1109 = vmatprep.subr.bf16.mxu0 %v846
    %1110 = vmatpush2.bf16.msra.mxu0 %v845
    %1111 = vmatprep.subr.bf16.mxu0 %v844
    %1112 = vmatpush2.bf16.msra.mxu0 %v843
    %1113 = vmatprep.subr.bf16.mxu0 %v842
    %1114 = vmatpush2.bf16.msra.mxu0 %v841
    %1115 = vmatprep.subr.bf16.mxu0 %v840
    %1116 = vmatpush2.bf16.msra.mxu0 %v839
    %1117 = vmatprep.subr.bf16.mxu0 %v838
    %1118 = vmatpush2.bf16.msra.mxu0 %v837
    %1119 = vmatprep.subr.bf16.mxu0 %v836
    %1120 = vmatpush2.bf16.msra.mxu0 %v835
    %1121 = vmatprep.subr.bf16.mxu0 %v834
    %1122 = vmatpush2.bf16.msra.mxu0 %v833
    %1123 = vmatprep.mubr.bf16.mxu0 %v355
    %1124 = vmatmul.mubr.bf16.gmra.mxu0 %v354
    %v1125 = vpop.f32.mrf.mxu0
    %v1126 = vadd.f32 %v1085, %v1125
    %v1127 = vpop.f32.mrf.mxu0
    %v1128 = vadd.f32 %v1087, %v1127
    %v1129 = vpop.f32.mrf.mxu0
    %v1130 = vpop.f32.mrf.mxu0
    %1131 = vdwg.mxu0
    %1132 = vmatprep.subr.bf16.mxu0 %v864
    %1133 = vmatpush1.bf16.msra.mxu0 %v863
    %1134 = vmatprep.subr.bf16.mxu0 %v862
    %1135 = vmatpush1.bf16.msra.mxu0 %v861
    %1136 = vmatprep.subr.bf16.mxu0 %v860
    %1137 = vmatpush1.bf16.msra.mxu0 %v859
    %1138 = vmatprep.subr.bf16.mxu0 %v858
    %1139 = vmatpush1.bf16.msra.mxu0 %v857
    %1140 = vmatprep.subr.bf16.mxu0 %v856
    %1141 = vmatpush1.bf16.msra.mxu0 %v855
    %1142 = vmatprep.subr.bf16.mxu0 %v854
    %1143 = vmatpush1.bf16.msra.mxu0 %v853
    %1144 = vmatprep.subr.bf16.mxu0 %v852
    %1145 = vmatpush1.bf16.msra.mxu0 %v851
    %1146 = vmatprep.subr.bf16.mxu0 %v850
    %1147 = vmatpush1.bf16.msra.mxu0 %v849
    %1148 = vmatprep.subr.bf16.mxu0 %v880
    %1149 = vmatpush2.bf16.msra.mxu0 %v879
    %1150 = vmatprep.subr.bf16.mxu0 %v878
    %1151 = vmatpush2.bf16.msra.mxu0 %v877
    %1152 = vmatprep.subr.bf16.mxu0 %v876
    %1153 = vmatpush2.bf16.msra.mxu0 %v875
    %1154 = vmatprep.subr.bf16.mxu0 %v874
    %1155 = vmatpush2.bf16.msra.mxu0 %v873
    %1156 = vmatprep.subr.bf16.mxu0 %v872
    %1157 = vmatpush2.bf16.msra.mxu0 %v871
    %1158 = vmatprep.subr.bf16.mxu0 %v870
    %1159 = vmatpush2.bf16.msra.mxu0 %v869
    %1160 = vmatprep.subr.bf16.mxu0 %v868
    %1161 = vmatpush2.bf16.msra.mxu0 %v867
    %1162 = vmatprep.subr.bf16.mxu0 %v866
    %1163 = vmatpush2.bf16.msra.mxu0 %v865
    %1164 = vmatprep.mubr.bf16.mxu0 %v357
    %1165 = vmatmul.mubr.bf16.gmra.mxu0 %v356
    %v1166 = vpop.f32.mrf.mxu0
    %v1167 = vadd.f32 %v1126, %v1166
    %v1168 = vpop.f32.mrf.mxu0
    %v1169 = vadd.f32 %v1128, %v1168
    %v1170 = vpop.f32.mrf.mxu0
    %v1171 = vpop.f32.mrf.mxu0
    %1172 = vdwg.mxu0
    %v1173 = vmax.f32 %v1167, 0.0
    %v1174 = vmax.f32 %v1169, 0.0
    %v1175 = vld [vmem:[%s3] sm:$0xf]
    %v1176 = vld [vmem:[%s3 + $0x4] sm:$0xf]
    %v1177 = vld [vmem:[%s3 + $0x8] sm:$0xf]
    %v1178 = vld [vmem:[%s3 + $0xc] sm:$0xf]
    %v1179 = vld [vmem:[%s3 + $0x10] sm:$0xf]
    %v1180 = vld [vmem:[%s3 + $0x14] sm:$0xf]
    %v1181 = vld [vmem:[%s3 + $0x18] sm:$0xf]
    %v1182 = vld [vmem:[%s3 + $0x1c] sm:$0xf]
    %v1183 = vld [vmem:[%s3 + $0x20] sm:$0xf]
    %v1184 = vld [vmem:[%s3 + $0x24] sm:$0xf]
    %v1185 = vld [vmem:[%s3 + $0x28] sm:$0xf]
    %v1186 = vld [vmem:[%s3 + $0x2c] sm:$0xf]
    %v1187 = vld [vmem:[%s3 + $0x30] sm:$0xf]
    %v1188 = vld [vmem:[%s3 + $0x34] sm:$0xf]
    %v1189 = vld [vmem:[%s3 + $0x38] sm:$0xf]
    %v1190 = vld [vmem:[%s3 + $0x3c] sm:$0xf]
    %v1191 = vld [vmem:[%s3 + $0x40] sm:$0xf]
    %v1192 = vld [vmem:[%s3 + $0x44] sm:$0xf]
    %v1193 = vld [vmem:[%s3 + $0x48] sm:$0xf]
    %v1194 = vld [vmem:[%s3 + $0x4c] sm:$0xf]
    %v1195 = vld [vmem:[%s3 + $0x50] sm:$0xf]
    %v1196 = vld [vmem:[%s3 + $0x54] sm:$0xf]
    %v1197 = vld [vmem:[%s3 + $0x58] sm:$0xf]
    %v1198 = vld [vmem:[%s3 + $0x5c] sm:$0xf]
    %v1199 = vld [vmem:[%s3 + $0x60] sm:$0xf]
    %v1200 = vld [vmem:[%s3 + $0x64] sm:$0xf]
    %v1201 = vld [vmem:[%s3 + $0x68] sm:$0xf]
    %v1202 = vld [vmem:[%s3 + $0x6c] sm:$0xf]
    %v1203 = vld [vmem:[%s3 + $0x70] sm:$0xf]
    %v1204 = vld [vmem:[%s3 + $0x74] sm:$0xf]
    %v1205 = vld [vmem:[%s3 + $0x78] sm:$0xf]
    %v1206 = vld [vmem:[%s3 + $0x7c] sm:$0xf]
    %v1207 = vld [vmem:[#allocation8] sm:$0x1]
    %v1208 = vpack.c.bf16 %v1173, %v1173
    %v1209 = vpack.c.bf16 %v1174, %v1174
    %v1211 = vlaneseq
    %v1212 = vshrl.u32 %v1211, 7
    %v1213 = vsub.s32 0, %v1212
    %v1214 = vrot.slane %v1207, %v1213
    %v1248 = vunpack.c.l.b16 %v1175
    %v1249 = vunpack.c.l.b16 %v1176
    %v1250 = vunpack.c.l.b16 %v1177
    %v1251 = vunpack.c.l.b16 %v1178
    %v1252 = vunpack.c.l.b16 %v1179
    %v1253 = vunpack.c.l.b16 %v1180
    %v1254 = vunpack.c.l.b16 %v1181
    %v1255 = vunpack.c.l.b16 %v1182
    %v1256 = vunpack.c.l.b16 %v1183
    %v1257 = vunpack.c.l.b16 %v1184
    %v1258 = vunpack.c.l.b16 %v1185
    %v1259 = vunpack.c.l.b16 %v1186
    %v1260 = vunpack.c.l.b16 %v1187
    %v1261 = vunpack.c.l.b16 %v1188
    %v1262 = vunpack.c.l.b16 %v1189
    %v1263 = vunpack.c.l.b16 %v1190
    %v1264 = vunpack.c.l.b16 %v1191
    %v1265 = vunpack.c.l.b16 %v1192
    %v1266 = vunpack.c.l.b16 %v1193
    %v1267 = vunpack.c.l.b16 %v1194
    %v1268 = vunpack.c.l.b16 %v1195
    %v1269 = vunpack.c.l.b16 %v1196
    %v1270 = vunpack.c.l.b16 %v1197
    %v1271 = vunpack.c.l.b16 %v1198
    %v1272 = vunpack.c.l.b16 %v1199
    %v1273 = vunpack.c.l.b16 %v1200
    %v1274 = vunpack.c.l.b16 %v1201
    %v1275 = vunpack.c.l.b16 %v1202
    %v1276 = vunpack.c.l.b16 %v1203
    %v1277 = vunpack.c.l.b16 %v1204
    %v1278 = vunpack.c.l.b16 %v1205
    %v1279 = vunpack.c.l.b16 %v1206
    %v1280 = vpack.c.b16 %v1249, %v1248
    %v1281 = vpack.c.b16 %v1251, %v1250
    %v1282 = vpack.c.b16 %v1253, %v1252
    %v1283 = vpack.c.b16 %v1255, %v1254
    %v1284 = vpack.c.b16 %v1257, %v1256
    %v1285 = vpack.c.b16 %v1259, %v1258
    %v1286 = vpack.c.b16 %v1261, %v1260
    %v1287 = vpack.c.b16 %v1263, %v1262
    %v1288 = vpack.c.b16 %v1265, %v1264
    %v1289 = vpack.c.b16 %v1267, %v1266
    %v1290 = vpack.c.b16 %v1269, %v1268
    %v1291 = vpack.c.b16 %v1271, %v1270
    %v1292 = vpack.c.b16 %v1273, %v1272
    %v1293 = vpack.c.b16 %v1275, %v1274
    %v1294 = vpack.c.b16 %v1277, %v1276
    %v1295 = vpack.c.b16 %v1279, %v1278
    %1312 = vmatprep.subr.bf16.mxu0 0
    %1313 = vmatpush1.bf16.msra.mxu0 %v1287
    %1314 = vmatprep.subr.bf16.mxu0 0
    %1315 = vmatpush1.bf16.msra.mxu0 %v1286
    %1316 = vmatprep.subr.bf16.mxu0 0
    %1317 = vmatpush1.bf16.msra.mxu0 %v1285
    %1318 = vmatprep.subr.bf16.mxu0 0
    %1319 = vmatpush1.bf16.msra.mxu0 %v1284
    %1320 = vmatprep.subr.bf16.mxu0 0
    %1321 = vmatpush1.bf16.msra.mxu0 %v1283
    %1322 = vmatprep.subr.bf16.mxu0 0
    %1323 = vmatpush1.bf16.msra.mxu0 %v1282
    %1324 = vmatprep.subr.bf16.mxu0 0
    %1325 = vmatpush1.bf16.msra.mxu0 %v1281
    %1326 = vmatprep.subr.bf16.mxu0 0
    %1327 = vmatpush1.bf16.msra.mxu0 %v1280
    %1328 = vmatprep.subr.bf16.mxu0 0
    %1329 = vmatpush2.bf16.msra.mxu0 %v1295
    %1330 = vmatprep.subr.bf16.mxu0 0
    %1331 = vmatpush2.bf16.msra.mxu0 %v1294
    %1332 = vmatprep.subr.bf16.mxu0 0
    %1333 = vmatpush2.bf16.msra.mxu0 %v1293
    %1334 = vmatprep.subr.bf16.mxu0 0
    %1335 = vmatpush2.bf16.msra.mxu0 %v1292
    %1336 = vmatprep.subr.bf16.mxu0 0
    %1337 = vmatpush2.bf16.msra.mxu0 %v1291
    %1338 = vmatprep.subr.bf16.mxu0 0
    %1339 = vmatpush2.bf16.msra.mxu0 %v1290
    %1340 = vmatprep.subr.bf16.mxu0 0
    %1341 = vmatpush2.bf16.msra.mxu0 %v1289
    %1342 = vmatprep.subr.bf16.mxu0 0
    %1343 = vmatpush2.bf16.msra.mxu0 %v1288
    %1344 = vmatprep.mubr.bf16.mxu0 %v1209
    %1345 = vmatmul.mubr.bf16.gmra.mxu0 %v1208
    %v1346 = vpop.f32.mrf.mxu0
    %v1347 = vadd.f32 %v1214, %v1346
    %v1348 = vpop.f32.mrf.mxu0
    %v1349 = vpop.f32.mrf.mxu0
    %v1350 = vpop.f32.mrf.mxu0
    %1351 = vdwg.mxu0
    %v1352 = vmax.f32 %v1347, 0.0
    %v1353 = vld [vmem:[%s5] sm:$0xf]
    %v1354 = vld [vmem:[%s5 + $0x4] sm:$0xf]
    %v1355 = vld [vmem:[%s5 + $0x8] sm:$0xf]
    %v1356 = vld [vmem:[%s5 + $0xc] sm:$0xf]
    %v1357 = vld [vmem:[%s5 + $0x10] sm:$0xf]
    %v1358 = vld [vmem:[%s5 + $0x14] sm:$0xf]
    %v1359 = vld [vmem:[%s5 + $0x18] sm:$0xf]
    %v1360 = vld [vmem:[%s5 + $0x1c] sm:$0xf]
    %v1361 = vld [vmem:[%s5 + $0x20] sm:$0xf]
    %v1362 = vld [vmem:[%s5 + $0x24] sm:$0xf]
    %v1363 = vld [vmem:[%s5 + $0x28] sm:$0xf]
    %v1364 = vld [vmem:[%s5 + $0x2c] sm:$0xf]
    %v1365 = vld [vmem:[%s5 + $0x30] sm:$0xf]
    %v1366 = vld [vmem:[%s5 + $0x34] sm:$0xf]
    %v1367 = vld [vmem:[%s5 + $0x38] sm:$0xf]
    %v1368 = vld [vmem:[%s5 + $0x3c] sm:$0xf]
    %v1369 = vld [vmem:[#allocation10] sm:$0x1]
    %v1370 = vpack.c.bf16 %v1352, %v1352
    %v1372 = vlaneseq
    %v1373 = vshrl.u32 %v1372, 7
    %v1374 = vsub.s32 0, %v1373
    %v1375 = vrot.slane %v1369, %v1374
    %v1393 = vunpack.c.l.b16 %v1353
    %v1394 = vunpack.c.l.b16 %v1354
    %v1395 = vunpack.c.l.b16 %v1355
    %v1396 = vunpack.c.l.b16 %v1356
    %v1397 = vunpack.c.l.b16 %v1357
    %v1398 = vunpack.c.l.b16 %v1358
    %v1399 = vunpack.c.l.b16 %v1359
    %v1400 = vunpack.c.l.b16 %v1360
    %v1401 = vunpack.c.l.b16 %v1361
    %v1402 = vunpack.c.l.b16 %v1362
    %v1403 = vunpack.c.l.b16 %v1363
    %v1404 = vunpack.c.l.b16 %v1364
    %v1405 = vunpack.c.l.b16 %v1365
    %v1406 = vunpack.c.l.b16 %v1366
    %v1407 = vunpack.c.l.b16 %v1367
    %v1408 = vunpack.c.l.b16 %v1368
    %v1409 = vpack.c.b16 %v1394, %v1393
    %v1410 = vpack.c.b16 %v1396, %v1395
    %v1411 = vpack.c.b16 %v1398, %v1397
    %v1412 = vpack.c.b16 %v1400, %v1399
    %v1413 = vpack.c.b16 %v1402, %v1401
    %v1414 = vpack.c.b16 %v1404, %v1403
    %v1415 = vpack.c.b16 %v1406, %v1405
    %v1416 = vpack.c.b16 %v1408, %v1407
    %1425 = vmatprep.subr.bf16.mxu0 0
    %1426 = vmatpush1.bf16.msra.mxu0 %v1416
    %1427 = vmatprep.subr.bf16.mxu0 0
    %1428 = vmatpush1.bf16.msra.mxu0 %v1415
    %1429 = vmatprep.subr.bf16.mxu0 0
    %1430 = vmatpush1.bf16.msra.mxu0 %v1414
    %1431 = vmatprep.subr.bf16.mxu0 0
    %1432 = vmatpush1.bf16.msra.mxu0 %v1413
    %1433 = vmatprep.subr.bf16.mxu0 0
    %1434 = vmatpush1.bf16.msra.mxu0 %v1412
    %1435 = vmatprep.subr.bf16.mxu0 0
    %1436 = vmatpush1.bf16.msra.mxu0 %v1411
    %1437 = vmatprep.subr.bf16.mxu0 0
    %1438 = vmatpush1.bf16.msra.mxu0 %v1410
    %1439 = vmatprep.subr.bf16.mxu0 0
    %1440 = vmatpush1.bf16.msra.mxu0 %v1409
    %1441 = vmatprep.subr.bf16.mxu0 0
    %1442 = vmatpush2.bf16.msra.mxu0 0
    %1443 = vmatprep.subr.bf16.mxu0 0
    %1444 = vmatpush2.bf16.msra.mxu0 0
    %1445 = vmatprep.subr.bf16.mxu0 0
    %1446 = vmatpush2.bf16.msra.mxu0 0
    %1447 = vmatprep.subr.bf16.mxu0 0
    %1448 = vmatpush2.bf16.msra.mxu0 0
    %1449 = vmatprep.subr.bf16.mxu0 0
    %1450 = vmatpush2.bf16.msra.mxu0 0
    %1451 = vmatprep.subr.bf16.mxu0 0
    %1452 = vmatpush2.bf16.msra.mxu0 0
    %1453 = vmatprep.subr.bf16.mxu0 0
    %1454 = vmatpush2.bf16.msra.mxu0 0
    %1455 = vmatprep.subr.bf16.mxu0 0
    %1456 = vmatpush2.bf16.msra.mxu0 0
    %1457 = vmatprep.mubr.bf16.mxu0 0
    %1458 = vmatmul.mubr.bf16.gmra.mxu0 %v1370
    %v1459 = vpop.f32.mrf.mxu0
    %v1460 = vadd.f32 %v1375, %v1459
    %v1461 = vpop.f32.mrf.mxu0
    %v1462 = vpop.f32.mrf.mxu0
    %v1463 = vpop.f32.mrf.mxu0
    %1464 = vdwg.mxu0
    %v1465 = vmax.f32 %v1460, 0.0
    %v1466 = vld [vmem:[%s7] sm:$0xf]
    %v1467 = vld [vmem:[%s7 + $0x4] sm:$0xf]
    %v1468 = vld [vmem:[%s7 + $0x8] sm:$0xf]
    %v1469 = vld [vmem:[%s7 + $0xc] sm:$0xf]
    %v1470 = vld [vmem:[%s7 + $0x10] sm:$0xf]
    %v1471 = vld [vmem:[%s7 + $0x14] sm:$0xf]
    %v1472 = vld [vmem:[%s7 + $0x18] sm:$0xf]
    %v1473 = vld [vmem:[%s7 + $0x1c] sm:$0xf]
    %v1474 = vld [vmem:[#allocation11] sm:$0x1]
    %v1475 = vpack.c.bf16 %v1465, %v1465
    %v1477 = vlaneseq
    %v1478 = vshrl.u32 %v1477, 7
    %v1479 = vsub.s32 0, %v1478
    %v1480 = vrot.slane %v1474, %v1479
    %v1490 = vunpack.c.l.b16 %v1466
    %v1491 = vunpack.c.l.b16 %v1467
    %v1492 = vunpack.c.l.b16 %v1468
    %v1493 = vunpack.c.l.b16 %v1469
    %v1494 = vunpack.c.l.b16 %v1470
    %v1495 = vunpack.c.l.b16 %v1471
    %v1496 = vunpack.c.l.b16 %v1472
    %v1497 = vunpack.c.l.b16 %v1473
    %v1498 = vpack.c.b16 %v1491, %v1490
    %v1499 = vpack.c.b16 %v1493, %v1492
    %v1500 = vpack.c.b16 %v1495, %v1494
    %v1501 = vpack.c.b16 %v1497, %v1496
    %vm1506 = vcmask 523264
    %v1508 = vsel %vm1506, %v1475, 0
    %1510 = vmatprep.subr.bf16.mxu0 0
    %1511 = vmatpush1.bf16.msra.mxu0 0
    %1512 = vmatprep.subr.bf16.mxu0 0
    %1513 = vmatpush1.bf16.msra.mxu0 0
    %1514 = vmatprep.subr.bf16.mxu0 0
    %1515 = vmatpush1.bf16.msra.mxu0 0
    %1516 = vmatprep.subr.bf16.mxu0 0
    %1517 = vmatpush1.bf16.msra.mxu0 0
    %1518 = vmatprep.subr.bf16.mxu0 0
    %1519 = vmatpush1.bf16.msra.mxu0 %v1501
    %1520 = vmatprep.subr.bf16.mxu0 0
    %1521 = vmatpush1.bf16.msra.mxu0 %v1500
    %1522 = vmatprep.subr.bf16.mxu0 0
    %1523 = vmatpush1.bf16.msra.mxu0 %v1499
    %1524 = vmatprep.subr.bf16.mxu0 0
    %1525 = vmatpush1.bf16.msra.mxu0 %v1498
    %1526 = vmatprep.subr.bf16.mxu0 0
    %1527 = vmatpush2.bf16.msra.mxu0 0
    %1528 = vmatprep.subr.bf16.mxu0 0
    %1529 = vmatpush2.bf16.msra.mxu0 0
    %1530 = vmatprep.subr.bf16.mxu0 0
    %1531 = vmatpush2.bf16.msra.mxu0 0
    %1532 = vmatprep.subr.bf16.mxu0 0
    %1533 = vmatpush2.bf16.msra.mxu0 0
    %1534 = vmatprep.subr.bf16.mxu0 0
    %1535 = vmatpush2.bf16.msra.mxu0 0
    %1536 = vmatprep.subr.bf16.mxu0 0
    %1537 = vmatpush2.bf16.msra.mxu0 0
    %1538 = vmatprep.subr.bf16.mxu0 0
    %1539 = vmatpush2.bf16.msra.mxu0 0
    %1540 = vmatprep.subr.bf16.mxu0 0
    %1541 = vmatpush2.bf16.msra.mxu0 0
    %1542 = vmatprep.mubr.bf16.mxu0 0
    %1543 = vmatmul.mubr.bf16.gmra.mxu0 %v1508
    %v1544 = vpop.f32.mrf.mxu0
    %v1545 = vadd.f32 %v1480, %v1544
    %v1546 = vpop.f32.mrf.mxu0
    %v1547 = vpop.f32.mrf.mxu0
    %v1548 = vpop.f32.mrf.mxu0
    %1549 = vdwg.mxu0
    %v1550 = vmax.f32 %v1545, 0.0
    %v1551 = vld [vmem:[#allocation13] sm:$0xf]
    %v1552 = vld [vmem:[#allocation13 + $0x4] sm:$0xf]
    %v1553 = vld [vmem:[#allocation13 + $0x8] sm:$0xf]
    %v1554 = vld [vmem:[#allocation13 + $0xc] sm:$0xf]
    %v1555 = vld [vmem:[%s10] sm:$0x1]
    %v1556 = vpack.c.bf16 %v1550, %v1550
    %v1558 = vlaneseq
    %v1559 = vshrl.u32 %v1558, 7
    %v1560 = vsub.s32 0, %v1559
    %v1561 = vrot.slane %v1555, %v1560
    %v1567 = vunpack.c.l.b16 %v1551
    %v1568 = vunpack.c.l.b16 %v1552
    %v1569 = vunpack.c.l.b16 %v1553
    %v1570 = vunpack.c.l.b16 %v1554
    %v1571 = vpack.c.b16 %v1568, %v1567
    %v1572 = vpack.c.b16 %v1570, %v1569
    %vm1575 = vcmask 261120
    %v1577 = vsel %vm1575, %v1556, 0
    %1579 = vmatprep.subr.bf16.mxu0 0
    %1580 = vmatpush1.bf16.msra.mxu0 0
    %1581 = vmatprep.subr.bf16.mxu0 0
    %1582 = vmatpush1.bf16.msra.mxu0 0
    %1583 = vmatprep.subr.bf16.mxu0 0
    %1584 = vmatpush1.bf16.msra.mxu0 0
    %1585 = vmatprep.subr.bf16.mxu0 0
    %1586 = vmatpush1.bf16.msra.mxu0 0
    %1587 = vmatprep.subr.bf16.mxu0 0
    %1588 = vmatpush1.bf16.msra.mxu0 0
    %1589 = vmatprep.subr.bf16.mxu0 0
    %1590 = vmatpush1.bf16.msra.mxu0 0
    %1591 = vmatprep.subr.bf16.mxu0 0
    %1592 = vmatpush1.bf16.msra.mxu0 %v1572
    %1593 = vmatprep.subr.bf16.mxu0 0
    %1594 = vmatpush1.bf16.msra.mxu0 %v1571
    %1595 = vmatprep.subr.bf16.mxu0 0
    %1596 = vmatpush2.bf16.msra.mxu0 0
    %1597 = vmatprep.subr.bf16.mxu0 0
    %1598 = vmatpush2.bf16.msra.mxu0 0
    %1599 = vmatprep.subr.bf16.mxu0 0
    %1600 = vmatpush2.bf16.msra.mxu0 0
    %1601 = vmatprep.subr.bf16.mxu0 0
    %1602 = vmatpush2.bf16.msra.mxu0 0
    %1603 = vmatprep.subr.bf16.mxu0 0
    %1604 = vmatpush2.bf16.msra.mxu0 0
    %1605 = vmatprep.subr.bf16.mxu0 0
    %1606 = vmatpush2.bf16.msra.mxu0 0
    %1607 = vmatprep.subr.bf16.mxu0 0
    %1608 = vmatpush2.bf16.msra.mxu0 0
    %1609 = vmatprep.subr.bf16.mxu0 0
    %1610 = vmatpush2.bf16.msra.mxu0 0
    %1611 = vmatprep.mubr.bf16.mxu0 0
    %1612 = vmatmul.mubr.bf16.gmra.mxu0 %v1577
    %v1613 = vpop.f32.mrf.mxu0
    %v1614 = vadd.f32 %v1561, %v1613
    %v1615 = vpop.f32.mrf.mxu0
    %v1616 = vpop.f32.mrf.mxu0
    %v1617 = vpop.f32.mrf.mxu0
    %1618 = vdwg.mxu0
    %v1619 = vmax.f32 %v1614, 0.0
    %v1620 = vld [vmem:[#allocation14] sm:$0xf]
    %v1621 = vld [vmem:[#allocation14 + $0x4] sm:$0xf]
    %v1622 = vld [vmem:[#allocation14 + $0x8] sm:$0xf]
    %v1623 = vld [vmem:[#allocation14 + $0xc] sm:$0xf]
    %v1624 = vld [vmem:[#allocation16] sm:$0x1]
    %v1625 = vpack.c.bf16 %v1619, %v1619
    %v1627 = vlaneseq
    %v1628 = vshrl.u32 %v1627, 7
    %v1629 = vsub.s32 0, %v1628
    %v1630 = vrot.slane %v1624, %v1629
    %v1636 = vunpack.c.l.b16 %v1620
    %v1637 = vunpack.c.l.b16 %v1621
    %v1638 = vunpack.c.l.b16 %v1622
    %v1639 = vunpack.c.l.b16 %v1623
    %v1640 = vpack.c.b16 %v1637, %v1636
    %v1641 = vpack.c.b16 %v1639, %v1638
    %v1645 = vsel %vm1575, %v1625, 0
    %1647 = vmatprep.subr.bf16.mxu0 0
    %1648 = vmatpush1.bf16.msra.mxu0 0
    %1649 = vmatprep.subr.bf16.mxu0 0
    %1650 = vmatpush1.bf16.msra.mxu0 0
    %1651 = vmatprep.subr.bf16.mxu0 0
    %1652 = vmatpush1.bf16.msra.mxu0 0
    %1653 = vmatprep.subr.bf16.mxu0 0
    %1654 = vmatpush1.bf16.msra.mxu0 0
    %1655 = vmatprep.subr.bf16.mxu0 0
    %1656 = vmatpush1.bf16.msra.mxu0 0
    %1657 = vmatprep.subr.bf16.mxu0 0
    %1658 = vmatpush1.bf16.msra.mxu0 0
    %1659 = vmatprep.subr.bf16.mxu0 0
    %1660 = vmatpush1.bf16.msra.mxu0 %v1641
    %1661 = vmatprep.subr.bf16.mxu0 0
    %1662 = vmatpush1.bf16.msra.mxu0 %v1640
    %1663 = vmatprep.subr.bf16.mxu0 0
    %1664 = vmatpush2.bf16.msra.mxu0 0
    %1665 = vmatprep.subr.bf16.mxu0 0
    %1666 = vmatpush2.bf16.msra.mxu0 0
    %1667 = vmatprep.subr.bf16.mxu0 0
    %1668 = vmatpush2.bf16.msra.mxu0 0
    %1669 = vmatprep.subr.bf16.mxu0 0
    %1670 = vmatpush2.bf16.msra.mxu0 0
    %1671 = vmatprep.subr.bf16.mxu0 0
    %1672 = vmatpush2.bf16.msra.mxu0 0
    %1673 = vmatprep.subr.bf16.mxu0 0
    %1674 = vmatpush2.bf16.msra.mxu0 0
    %1675 = vmatprep.subr.bf16.mxu0 0
    %1676 = vmatpush2.bf16.msra.mxu0 0
    %1677 = vmatprep.subr.bf16.mxu0 0
    %1678 = vmatpush2.bf16.msra.mxu0 0
    %1679 = vmatprep.mubr.bf16.mxu0 0
    %1680 = vmatmul.mubr.bf16.gmra.mxu0 %v1645
    %v1681 = vpop.f32.mrf.mxu0
    %v1682 = vadd.f32 %v1630, %v1681
    %v1683 = vpop.f32.mrf.mxu0
    %v1684 = vpop.f32.mrf.mxu0
    %v1685 = vpop.f32.mrf.mxu0
    %1686 = vdwg.mxu0
    %v1687 = vmax.f32 %v1682, 0.0
    %v1688 = vld [vmem:[%s13] sm:$0xf]
    %v1689 = vld [vmem:[%s13 + $0x4] sm:$0xf]
    %v1690 = vld [vmem:[%s13 + $0x8] sm:$0xf]
    %v1691 = vld [vmem:[%s13 + $0xc] sm:$0xf]
    %v1692 = vld [vmem:[%s13 + $0x10] sm:$0xf]
    %v1693 = vld [vmem:[%s13 + $0x14] sm:$0xf]
    %v1694 = vld [vmem:[%s13 + $0x18] sm:$0xf]
    %v1695 = vld [vmem:[%s13 + $0x1c] sm:$0xf]
    %v1696 = vld [vmem:[#allocation17] sm:$0x1]
    %v1697 = vpack.c.bf16 %v1687, %v1687
    %v1699 = vlaneseq
    %v1700 = vshrl.u32 %v1699, 7
    %v1701 = vsub.s32 0, %v1700
    %v1702 = vrot.slane %v1696, %v1701
    %v1712 = vunpack.c.l.b16 %v1688
    %v1713 = vunpack.c.l.b16 %v1689
    %v1714 = vunpack.c.l.b16 %v1690
    %v1715 = vunpack.c.l.b16 %v1691
    %v1716 = vunpack.c.l.b16 %v1692
    %v1717 = vunpack.c.l.b16 %v1693
    %v1718 = vunpack.c.l.b16 %v1694
    %v1719 = vunpack.c.l.b16 %v1695
    %v1720 = vpack.c.b16 %v1713, %v1712
    %v1721 = vpack.c.b16 %v1715, %v1714
    %v1722 = vpack.c.b16 %v1717, %v1716
    %v1723 = vpack.c.b16 %v1719, %v1718
    %v1729 = vsel %vm1506, %v1697, 0
    %1731 = vmatprep.subr.bf16.mxu0 0
    %1732 = vmatpush1.bf16.msra.mxu0 0
    %1733 = vmatprep.subr.bf16.mxu0 0
    %1734 = vmatpush1.bf16.msra.mxu0 0
    %1735 = vmatprep.subr.bf16.mxu0 0
    %1736 = vmatpush1.bf16.msra.mxu0 0
    %1737 = vmatprep.subr.bf16.mxu0 0
    %1738 = vmatpush1.bf16.msra.mxu0 0
    %1739 = vmatprep.subr.bf16.mxu0 0
    %1740 = vmatpush1.bf16.msra.mxu0 %v1723
    %1741 = vmatprep.subr.bf16.mxu0 0
    %1742 = vmatpush1.bf16.msra.mxu0 %v1722
    %1743 = vmatprep.subr.bf16.mxu0 0
    %1744 = vmatpush1.bf16.msra.mxu0 %v1721
    %1745 = vmatprep.subr.bf16.mxu0 0
    %1746 = vmatpush1.bf16.msra.mxu0 %v1720
    %1747 = vmatprep.subr.bf16.mxu0 0
    %1748 = vmatpush2.bf16.msra.mxu0 0
    %1749 = vmatprep.subr.bf16.mxu0 0
    %1750 = vmatpush2.bf16.msra.mxu0 0
    %1751 = vmatprep.subr.bf16.mxu0 0
    %1752 = vmatpush2.bf16.msra.mxu0 0
    %1753 = vmatprep.subr.bf16.mxu0 0
    %1754 = vmatpush2.bf16.msra.mxu0 0
    %1755 = vmatprep.subr.bf16.mxu0 0
    %1756 = vmatpush2.bf16.msra.mxu0 0
    %1757 = vmatprep.subr.bf16.mxu0 0
    %1758 = vmatpush2.bf16.msra.mxu0 0
    %1759 = vmatprep.subr.bf16.mxu0 0
    %1760 = vmatpush2.bf16.msra.mxu0 0
    %1761 = vmatprep.subr.bf16.mxu0 0
    %1762 = vmatpush2.bf16.msra.mxu0 0
    %1763 = vmatprep.mubr.bf16.mxu0 0
    %1764 = vmatmul.mubr.bf16.gmra.mxu0 %v1729
    %v1765 = vpop.f32.mrf.mxu0
    %v1766 = vadd.f32 %v1702, %v1765
    %v1767 = vpop.f32.mrf.mxu0
    %v1768 = vpop.f32.mrf.mxu0
    %v1769 = vpop.f32.mrf.mxu0
    %1770 = vdwg.mxu0
    %v1771 = vmax.f32 %v1766, 0.0
    %v1772 = vld [vmem:[#allocation19] sm:$0xff]
    %v1773 = vld [vmem:[#allocation19 + $0x8] sm:$0xff]
    %v1774 = vld [vmem:[#allocation19 + $0x10] sm:$0xff]
    %v1775 = vld [vmem:[#allocation19 + $0x18] sm:$0xff]
    %v1776 = vld [vmem:[#allocation19 + $0x20] sm:$0xff]
    %v1777 = vld [vmem:[#allocation19 + $0x28] sm:$0xff]
    %v1778 = vld [vmem:[#allocation19 + $0x30] sm:$0xff]
    %v1779 = vld [vmem:[#allocation19 + $0x38] sm:$0xff]
    %v1780 = vld [vmem:[#allocation19 + $0x40] sm:$0xff]
    %v1781 = vld [vmem:[#allocation19 + $0x48] sm:$0xff]
    %v1782 = vld [vmem:[#allocation19 + $0x50] sm:$0xff]
    %v1783 = vld [vmem:[#allocation19 + $0x58] sm:$0xff]
    %v1784 = vld [vmem:[#allocation19 + $0x60] sm:$0xff]
    %v1785 = vld [vmem:[#allocation19 + $0x68] sm:$0xff]
    %v1786 = vld [vmem:[#allocation19 + $0x70] sm:$0xff]
    %v1787 = vld [vmem:[#allocation19 + $0x78] sm:$0xff]
    %v1788 = vld [vmem:[%s16] sm:$0x3]
    %v1789 = vpack.c.bf16 %v1771, %v1771
    %v1791 = vlaneseq
    %v1792 = vshrl.u32 %v1791, 7
    %v1793 = vsub.s32 0, %v1792
    %v1794 = vrot.slane %v1788, %v1793
    %v1795 = vlaneseq
    %v1796 = vshrl.u32 %v1795, 7
    %v1797 = vsub.s32 1, %v1796
    %v1798 = vrot.slane %v1788, %v1797
    %v1817 = vunpack.c.l.b16 %v1772
    %v1818 = vunpack.c.h.b16 %v1772
    %v1819 = vunpack.c.l.b16 %v1773
    %v1820 = vunpack.c.h.b16 %v1773
    %v1821 = vunpack.c.l.b16 %v1774
    %v1822 = vunpack.c.h.b16 %v1774
    %v1823 = vunpack.c.l.b16 %v1775
    %v1824 = vunpack.c.h.b16 %v1775
    %v1825 = vunpack.c.l.b16 %v1776
    %v1826 = vunpack.c.h.b16 %v1776
    %v1827 = vunpack.c.l.b16 %v1777
    %v1828 = vunpack.c.h.b16 %v1777
    %v1829 = vunpack.c.l.b16 %v1778
    %v1830 = vunpack.c.h.b16 %v1778
    %v1831 = vunpack.c.l.b16 %v1779
    %v1832 = vunpack.c.h.b16 %v1779
    %v1833 = vunpack.c.l.b16 %v1780
    %v1834 = vunpack.c.h.b16 %v1780
    %v1835 = vunpack.c.l.b16 %v1781
    %v1836 = vunpack.c.h.b16 %v1781
    %v1837 = vunpack.c.l.b16 %v1782
    %v1838 = vunpack.c.h.b16 %v1782
    %v1839 = vunpack.c.l.b16 %v1783
    %v1840 = vunpack.c.h.b16 %v1783
    %v1841 = vunpack.c.l.b16 %v1784
    %v1842 = vunpack.c.h.b16 %v1784
    %v1843 = vunpack.c.l.b16 %v1785
    %v1844 = vunpack.c.h.b16 %v1785
    %v1845 = vunpack.c.l.b16 %v1786
    %v1846 = vunpack.c.h.b16 %v1786
    %v1847 = vunpack.c.l.b16 %v1787
    %v1848 = vunpack.c.h.b16 %v1787
    %v1849 = vpack.c.b16 %v1819, %v1817
    %v1850 = vpack.c.b16 %v1820, %v1818
    %v1851 = vpack.c.b16 %v1823, %v1821
    %v1852 = vpack.c.b16 %v1824, %v1822
    %v1853 = vpack.c.b16 %v1827, %v1825
    %v1854 = vpack.c.b16 %v1828, %v1826
    %v1855 = vpack.c.b16 %v1831, %v1829
    %v1856 = vpack.c.b16 %v1832, %v1830
    %v1857 = vpack.c.b16 %v1835, %v1833
    %v1858 = vpack.c.b16 %v1836, %v1834
    %v1859 = vpack.c.b16 %v1839, %v1837
    %v1860 = vpack.c.b16 %v1840, %v1838
    %v1861 = vpack.c.b16 %v1843, %v1841
    %v1862 = vpack.c.b16 %v1844, %v1842
    %v1863 = vpack.c.b16 %v1847, %v1845
    %v1864 = vpack.c.b16 %v1848, %v1846
    %1881 = vmatprep.subr.bf16.mxu0 %v1864
    %1882 = vmatpush1.bf16.msra.mxu0 %v1863
    %1883 = vmatprep.subr.bf16.mxu0 %v1862
    %1884 = vmatpush1.bf16.msra.mxu0 %v1861
    %1885 = vmatprep.subr.bf16.mxu0 %v1860
    %1886 = vmatpush1.bf16.msra.mxu0 %v1859
    %1887 = vmatprep.subr.bf16.mxu0 %v1858
    %1888 = vmatpush1.bf16.msra.mxu0 %v1857
    %1889 = vmatprep.subr.bf16.mxu0 %v1856
    %1890 = vmatpush1.bf16.msra.mxu0 %v1855
    %1891 = vmatprep.subr.bf16.mxu0 %v1854
    %1892 = vmatpush1.bf16.msra.mxu0 %v1853
    %1893 = vmatprep.subr.bf16.mxu0 %v1852
    %1894 = vmatpush1.bf16.msra.mxu0 %v1851
    %1895 = vmatprep.subr.bf16.mxu0 %v1850
    %1896 = vmatpush1.bf16.msra.mxu0 %v1849
    %1897 = vmatprep.subr.bf16.mxu0 0
    %1898 = vmatpush2.bf16.msra.mxu0 0
    %1899 = vmatprep.subr.bf16.mxu0 0
    %1900 = vmatpush2.bf16.msra.mxu0 0
    %1901 = vmatprep.subr.bf16.mxu0 0
    %1902 = vmatpush2.bf16.msra.mxu0 0
    %1903 = vmatprep.subr.bf16.mxu0 0
    %1904 = vmatpush2.bf16.msra.mxu0 0
    %1905 = vmatprep.subr.bf16.mxu0 0
    %1906 = vmatpush2.bf16.msra.mxu0 0
    %1907 = vmatprep.subr.bf16.mxu0 0
    %1908 = vmatpush2.bf16.msra.mxu0 0
    %1909 = vmatprep.subr.bf16.mxu0 0
    %1910 = vmatpush2.bf16.msra.mxu0 0
    %1911 = vmatprep.subr.bf16.mxu0 0
    %1912 = vmatpush2.bf16.msra.mxu0 0
    %1913 = vmatprep.mubr.bf16.mxu0 0
    %1914 = vmatmul.mubr.bf16.gmra.mxu0 %v1789
    %v1915 = vpop.f32.mrf.mxu0
    %v1916 = vadd.f32 %v1794, %v1915
    %v1917 = vpop.f32.mrf.mxu0
    %v1918 = vadd.f32 %v1798, %v1917
    %v1919 = vpop.f32.mrf.mxu0
    %v1920 = vpop.f32.mrf.mxu0
    %1921 = vdwg.mxu0
    %v1922 = vmax.f32 %v1916, 0.0
    %v1923 = vmax.f32 %v1918, 0.0
    %v1924 = vld [vmem:[#allocation20] sm:$0xff]
    %v1925 = vld [vmem:[#allocation20 + $0x8] sm:$0xff]
    %v1926 = vld [vmem:[#allocation20 + $0x10] sm:$0xff]
    %v1927 = vld [vmem:[#allocation20 + $0x18] sm:$0xff]
    %v1928 = vld [vmem:[#allocation20 + $0x20] sm:$0xff]
    %v1929 = vld [vmem:[#allocation20 + $0x28] sm:$0xff]
    %v1930 = vld [vmem:[#allocation20 + $0x30] sm:$0xff]
    %v1931 = vld [vmem:[#allocation20 + $0x38] sm:$0xff]
    %v1932 = vld [vmem:[#allocation20 + $0x40] sm:$0xff]
    %v1933 = vld [vmem:[#allocation20 + $0x48] sm:$0xff]
    %v1934 = vld [vmem:[#allocation20 + $0x50] sm:$0xff]
    %v1935 = vld [vmem:[#allocation20 + $0x58] sm:$0xff]
    %v1936 = vld [vmem:[#allocation20 + $0x60] sm:$0xff]
    %v1937 = vld [vmem:[#allocation20 + $0x68] sm:$0xff]
    %v1938 = vld [vmem:[#allocation20 + $0x70] sm:$0xff]
    %v1939 = vld [vmem:[#allocation20 + $0x78] sm:$0xff]
    %v1940 = vld [vmem:[#allocation20 + $0x80] sm:$0xff]
    %v1941 = vld [vmem:[#allocation20 + $0x88] sm:$0xff]
    %v1942 = vld [vmem:[#allocation20 + $0x90] sm:$0xff]
    %v1943 = vld [vmem:[#allocation20 + $0x98] sm:$0xff]
    %v1944 = vld [vmem:[#allocation20 + $0xa0] sm:$0xff]
    %v1945 = vld [vmem:[#allocation20 + $0xa8] sm:$0xff]
    %v1946 = vld [vmem:[#allocation20 + $0xb0] sm:$0xff]
    %v1947 = vld [vmem:[#allocation20 + $0xb8] sm:$0xff]
    %v1948 = vld [vmem:[#allocation20 + $0xc0] sm:$0xff]
    %v1949 = vld [vmem:[#allocation20 + $0xc8] sm:$0xff]
    %v1950 = vld [vmem:[#allocation20 + $0xd0] sm:$0xff]
    %v1951 = vld [vmem:[#allocation20 + $0xd8] sm:$0xff]
    %v1952 = vld [vmem:[#allocation20 + $0xe0] sm:$0xff]
    %v1953 = vld [vmem:[#allocation20 + $0xe8] sm:$0xff]
    %v1954 = vld [vmem:[#allocation20 + $0xf0] sm:$0xff]
    %v1955 = vld [vmem:[#allocation20 + $0xf8] sm:$0xff]
    %v1956 = vld [vmem:[#allocation20 + $0x100] sm:$0xff]
    %v1957 = vld [vmem:[#allocation20 + $0x108] sm:$0xff]
    %v1958 = vld [vmem:[#allocation20 + $0x110] sm:$0xff]
    %v1959 = vld [vmem:[#allocation20 + $0x118] sm:$0xff]
    %v1960 = vld [vmem:[#allocation20 + $0x120] sm:$0xff]
    %v1961 = vld [vmem:[#allocation20 + $0x128] sm:$0xff]
    %v1962 = vld [vmem:[#allocation20 + $0x130] sm:$0xff]
    %v1963 = vld [vmem:[#allocation20 + $0x138] sm:$0xff]
    %v1964 = vld [vmem:[#allocation20 + $0x140] sm:$0xff]
    %v1965 = vld [vmem:[#allocation20 + $0x148] sm:$0xff]
    %v1966 = vld [vmem:[#allocation20 + $0x150] sm:$0xff]
    %v1967 = vld [vmem:[#allocation20 + $0x158] sm:$0xff]
    %v1968 = vld [vmem:[#allocation20 + $0x160] sm:$0xff]
    %v1969 = vld [vmem:[#allocation20 + $0x168] sm:$0xff]
    %v1970 = vld [vmem:[#allocation20 + $0x170] sm:$0xff]
    %v1971 = vld [vmem:[#allocation20 + $0x178] sm:$0xff]
    %v1972 = vld [vmem:[#allocation20 + $0x180] sm:$0xff]
    %v1973 = vld [vmem:[#allocation20 + $0x188] sm:$0xff]
    %v1974 = vld [vmem:[#allocation20 + $0x190] sm:$0xff]
    %v1975 = vld [vmem:[#allocation20 + $0x198] sm:$0xff]
    %v1976 = vld [vmem:[#allocation20 + $0x1a0] sm:$0xff]
    %v1977 = vld [vmem:[#allocation20 + $0x1a8] sm:$0xff]
    %v1978 = vld [vmem:[#allocation20 + $0x1b0] sm:$0xff]
    %v1979 = vld [vmem:[#allocation20 + $0x1b8] sm:$0xff]
    %v1980 = vld [vmem:[#allocation20 + $0x1c0] sm:$0xff]
    %v1981 = vld [vmem:[#allocation20 + $0x1c8] sm:$0xff]
    %v1982 = vld [vmem:[#allocation20 + $0x1d0] sm:$0xff]
    %v1983 = vld [vmem:[#allocation20 + $0x1d8] sm:$0xff]
    %v1984 = vld [vmem:[#allocation20 + $0x1e0] sm:$0xff]
    %v1985 = vld [vmem:[#allocation20 + $0x1e8] sm:$0xff]
    %v1986 = vld [vmem:[#allocation20 + $0x1f0] sm:$0xff]
    %v1987 = vld [vmem:[#allocation20 + $0x1f8] sm:$0xff]
    %v1988 = vld [vmem:[#allocation20 + $0x200] sm:$0xff]
    %v1989 = vld [vmem:[#allocation20 + $0x208] sm:$0xff]
    %v1990 = vld [vmem:[#allocation20 + $0x210] sm:$0xff]
    %v1991 = vld [vmem:[#allocation20 + $0x218] sm:$0xff]
    %v1992 = vld [vmem:[#allocation20 + $0x220] sm:$0xff]
    %v1993 = vld [vmem:[#allocation20 + $0x228] sm:$0xff]
    %v1994 = vld [vmem:[#allocation20 + $0x230] sm:$0xff]
    %v1995 = vld [vmem:[#allocation20 + $0x238] sm:$0xff]
    %v1996 = vld [vmem:[#allocation20 + $0x240] sm:$0xff]
    %v1997 = vld [vmem:[#allocation20 + $0x248] sm:$0xff]
    %v1998 = vld [vmem:[#allocation20 + $0x250] sm:$0xff]
    %v1999 = vld [vmem:[#allocation20 + $0x258] sm:$0xff]
    %v2000 = vld [vmem:[#allocation20 + $0x260] sm:$0xff]
    %v2001 = vld [vmem:[#allocation20 + $0x268] sm:$0xff]
    %v2002 = vld [vmem:[#allocation20 + $0x270] sm:$0xff]
    %v2003 = vld [vmem:[#allocation20 + $0x278] sm:$0xff]
    %v2004 = vld [vmem:[#allocation20 + $0x280] sm:$0xff]
    %v2005 = vld [vmem:[#allocation20 + $0x288] sm:$0xff]
    %v2006 = vld [vmem:[#allocation20 + $0x290] sm:$0xff]
    %v2007 = vld [vmem:[#allocation20 + $0x298] sm:$0xff]
    %v2008 = vld [vmem:[#allocation20 + $0x2a0] sm:$0xff]
    %v2009 = vld [vmem:[#allocation20 + $0x2a8] sm:$0xff]
    %v2010 = vld [vmem:[#allocation20 + $0x2b0] sm:$0xff]
    %v2011 = vld [vmem:[#allocation20 + $0x2b8] sm:$0xff]
    %v2012 = vld [vmem:[#allocation20 + $0x2c0] sm:$0xff]
    %v2013 = vld [vmem:[#allocation20 + $0x2c8] sm:$0xff]
    %v2014 = vld [vmem:[#allocation20 + $0x2d0] sm:$0xff]
    %v2015 = vld [vmem:[#allocation20 + $0x2d8] sm:$0xff]
    %v2016 = vld [vmem:[#allocation20 + $0x2e0] sm:$0xff]
    %v2017 = vld [vmem:[#allocation20 + $0x2e8] sm:$0xff]
    %v2018 = vld [vmem:[#allocation20 + $0x2f0] sm:$0xff]
    %v2019 = vld [vmem:[#allocation20 + $0x2f8] sm:$0xff]
    %v2020 = vld [vmem:[#allocation20 + $0x300] sm:$0xff]
    %v2021 = vld [vmem:[#allocation20 + $0x308] sm:$0xff]
    %v2022 = vld [vmem:[#allocation20 + $0x310] sm:$0xff]
    %v2023 = vld [vmem:[#allocation20 + $0x318] sm:$0xff]
    %v2024 = vld [vmem:[#allocation20 + $0x320] sm:$0xff]
    %v2025 = vld [vmem:[#allocation20 + $0x328] sm:$0xff]
    %v2026 = vld [vmem:[#allocation20 + $0x330] sm:$0xff]
    %v2027 = vld [vmem:[#allocation20 + $0x338] sm:$0xff]
    %v2028 = vld [vmem:[#allocation20 + $0x340] sm:$0xff]
    %v2029 = vld [vmem:[#allocation20 + $0x348] sm:$0xff]
    %v2030 = vld [vmem:[#allocation20 + $0x350] sm:$0xff]
    %v2031 = vld [vmem:[#allocation20 + $0x358] sm:$0xff]
    %v2032 = vld [vmem:[#allocation20 + $0x360] sm:$0xff]
    %v2033 = vld [vmem:[#allocation20 + $0x368] sm:$0xff]
    %v2034 = vld [vmem:[#allocation20 + $0x370] sm:$0xff]
    %v2035 = vld [vmem:[#allocation20 + $0x378] sm:$0xff]
    %v2036 = vld [vmem:[#allocation20 + $0x380] sm:$0xff]
    %v2037 = vld [vmem:[#allocation20 + $0x388] sm:$0xff]
    %v2038 = vld [vmem:[#allocation20 + $0x390] sm:$0xff]
    %v2039 = vld [vmem:[#allocation20 + $0x398] sm:$0xff]
    %v2040 = vld [vmem:[#allocation20 + $0x3a0] sm:$0xff]
    %v2041 = vld [vmem:[#allocation20 + $0x3a8] sm:$0xff]
    %v2042 = vld [vmem:[#allocation20 + $0x3b0] sm:$0xff]
    %v2043 = vld [vmem:[#allocation20 + $0x3b8] sm:$0xff]
    %v2044 = vld [vmem:[#allocation20 + $0x3c0] sm:$0xff]
    %v2045 = vld [vmem:[#allocation20 + $0x3c8] sm:$0xff]
    %v2046 = vld [vmem:[#allocation20 + $0x3d0] sm:$0xff]
    %v2047 = vld [vmem:[#allocation20 + $0x3d8] sm:$0xff]
    %v2048 = vld [vmem:[#allocation20 + $0x3e0] sm:$0xff]
    %v2049 = vld [vmem:[#allocation20 + $0x3e8] sm:$0xff]
    %v2050 = vld [vmem:[#allocation20 + $0x3f0] sm:$0xff]
    %v2051 = vld [vmem:[#allocation20 + $0x3f8] sm:$0xff]
    %v2052 = vld [vmem:[%s18] sm:$0xff]
    %v2053 = vpack.c.bf16 %v1922, %v1922
    %v2054 = vpack.c.bf16 %v1923, %v1923
    %v2056 = vlaneseq
    %v2057 = vshrl.u32 %v2056, 7
    %v2058 = vsub.s32 0, %v2057
    %v2059 = vrot.slane %v2052, %v2058
    %v2060 = vlaneseq
    %v2061 = vshrl.u32 %v2060, 7
    %v2062 = vsub.s32 1, %v2061
    %v2063 = vrot.slane %v2052, %v2062
    %v2064 = vlaneseq
    %v2065 = vshrl.u32 %v2064, 7
    %v2066 = vsub.s32 2, %v2065
    %v2067 = vrot.slane %v2052, %v2066
    %v2068 = vlaneseq
    %v2069 = vshrl.u32 %v2068, 7
    %v2070 = vsub.s32 3, %v2069
    %v2071 = vrot.slane %v2052, %v2070
    %v2072 = vlaneseq
    %v2073 = vshrl.u32 %v2072, 7
    %v2074 = vsub.s32 4, %v2073
    %v2075 = vrot.slane %v2052, %v2074
    %v2076 = vlaneseq
    %v2077 = vshrl.u32 %v2076, 7
    %v2078 = vsub.s32 5, %v2077
    %v2079 = vrot.slane %v2052, %v2078
    %v2080 = vlaneseq
    %v2081 = vshrl.u32 %v2080, 7
    %v2082 = vsub.s32 6, %v2081
    %v2083 = vrot.slane %v2052, %v2082
    %v2084 = vlaneseq
    %v2085 = vshrl.u32 %v2084, 7
    %v2086 = vsub.s32 7, %v2085
    %v2087 = vrot.slane %v2052, %v2086
    %v2224 = vunpack.c.l.b16 %v1924
    %v2225 = vunpack.c.h.b16 %v1924
    %v2226 = vunpack.c.l.b16 %v1925
    %v2227 = vunpack.c.h.b16 %v1925
    %v2228 = vunpack.c.l.b16 %v1926
    %v2229 = vunpack.c.h.b16 %v1926
    %v2230 = vunpack.c.l.b16 %v1927
    %v2231 = vunpack.c.h.b16 %v1927
    %v2232 = vunpack.c.l.b16 %v1928
    %v2233 = vunpack.c.h.b16 %v1928
    %v2234 = vunpack.c.l.b16 %v1929
    %v2235 = vunpack.c.h.b16 %v1929
    %v2236 = vunpack.c.l.b16 %v1930
    %v2237 = vunpack.c.h.b16 %v1930
    %v2238 = vunpack.c.l.b16 %v1931
    %v2239 = vunpack.c.h.b16 %v1931
    %v2240 = vunpack.c.l.b16 %v1932
    %v2241 = vunpack.c.h.b16 %v1932
    %v2242 = vunpack.c.l.b16 %v1933
    %v2243 = vunpack.c.h.b16 %v1933
    %v2244 = vunpack.c.l.b16 %v1934
    %v2245 = vunpack.c.h.b16 %v1934
    %v2246 = vunpack.c.l.b16 %v1935
    %v2247 = vunpack.c.h.b16 %v1935
    %v2248 = vunpack.c.l.b16 %v1936
    %v2249 = vunpack.c.h.b16 %v1936
    %v2250 = vunpack.c.l.b16 %v1937
    %v2251 = vunpack.c.h.b16 %v1937
    %v2252 = vunpack.c.l.b16 %v1938
    %v2253 = vunpack.c.h.b16 %v1938
    %v2254 = vunpack.c.l.b16 %v1939
    %v2255 = vunpack.c.h.b16 %v1939
    %v2256 = vunpack.c.l.b16 %v1940
    %v2257 = vunpack.c.h.b16 %v1940
    %v2258 = vunpack.c.l.b16 %v1941
    %v2259 = vunpack.c.h.b16 %v1941
    %v2260 = vunpack.c.l.b16 %v1942
    %v2261 = vunpack.c.h.b16 %v1942
    %v2262 = vunpack.c.l.b16 %v1943
    %v2263 = vunpack.c.h.b16 %v1943
    %v2264 = vunpack.c.l.b16 %v1944
    %v2265 = vunpack.c.h.b16 %v1944
    %v2266 = vunpack.c.l.b16 %v1945
    %v2267 = vunpack.c.h.b16 %v1945
    %v2268 = vunpack.c.l.b16 %v1946
    %v2269 = vunpack.c.h.b16 %v1946
    %v2270 = vunpack.c.l.b16 %v1947
    %v2271 = vunpack.c.h.b16 %v1947
    %v2272 = vunpack.c.l.b16 %v1948
    %v2273 = vunpack.c.h.b16 %v1948
    %v2274 = vunpack.c.l.b16 %v1949
    %v2275 = vunpack.c.h.b16 %v1949
    %v2276 = vunpack.c.l.b16 %v1950
    %v2277 = vunpack.c.h.b16 %v1950
    %v2278 = vunpack.c.l.b16 %v1951
    %v2279 = vunpack.c.h.b16 %v1951
    %v2280 = vunpack.c.l.b16 %v1952
    %v2281 = vunpack.c.h.b16 %v1952
    %v2282 = vunpack.c.l.b16 %v1953
    %v2283 = vunpack.c.h.b16 %v1953
    %v2284 = vunpack.c.l.b16 %v1954
    %v2285 = vunpack.c.h.b16 %v1954
    %v2286 = vunpack.c.l.b16 %v1955
    %v2287 = vunpack.c.h.b16 %v1955
    %v2288 = vunpack.c.l.b16 %v1956
    %v2289 = vunpack.c.h.b16 %v1956
    %v2290 = vunpack.c.l.b16 %v1957
    %v2291 = vunpack.c.h.b16 %v1957
    %v2292 = vunpack.c.l.b16 %v1958
    %v2293 = vunpack.c.h.b16 %v1958
    %v2294 = vunpack.c.l.b16 %v1959
    %v2295 = vunpack.c.h.b16 %v1959
    %v2296 = vunpack.c.l.b16 %v1960
    %v2297 = vunpack.c.h.b16 %v1960
    %v2298 = vunpack.c.l.b16 %v1961
    %v2299 = vunpack.c.h.b16 %v1961
    %v2300 = vunpack.c.l.b16 %v1962
    %v2301 = vunpack.c.h.b16 %v1962
    %v2302 = vunpack.c.l.b16 %v1963
    %v2303 = vunpack.c.h.b16 %v1963
    %v2304 = vunpack.c.l.b16 %v1964
    %v2305 = vunpack.c.h.b16 %v1964
    %v2306 = vunpack.c.l.b16 %v1965
    %v2307 = vunpack.c.h.b16 %v1965
    %v2308 = vunpack.c.l.b16 %v1966
    %v2309 = vunpack.c.h.b16 %v1966
    %v2310 = vunpack.c.l.b16 %v1967
    %v2311 = vunpack.c.h.b16 %v1967
    %v2312 = vunpack.c.l.b16 %v1968
    %v2313 = vunpack.c.h.b16 %v1968
    %v2314 = vunpack.c.l.b16 %v1969
    %v2315 = vunpack.c.h.b16 %v1969
    %v2316 = vunpack.c.l.b16 %v1970
    %v2317 = vunpack.c.h.b16 %v1970
    %v2318 = vunpack.c.l.b16 %v1971
    %v2319 = vunpack.c.h.b16 %v1971
    %v2320 = vunpack.c.l.b16 %v1972
    %v2321 = vunpack.c.h.b16 %v1972
    %v2322 = vunpack.c.l.b16 %v1973
    %v2323 = vunpack.c.h.b16 %v1973
    %v2324 = vunpack.c.l.b16 %v1974
    %v2325 = vunpack.c.h.b16 %v1974
    %v2326 = vunpack.c.l.b16 %v1975
    %v2327 = vunpack.c.h.b16 %v1975
    %v2328 = vunpack.c.l.b16 %v1976
    %v2329 = vunpack.c.h.b16 %v1976
    %v2330 = vunpack.c.l.b16 %v1977
    %v2331 = vunpack.c.h.b16 %v1977
    %v2332 = vunpack.c.l.b16 %v1978
    %v2333 = vunpack.c.h.b16 %v1978
    %v2334 = vunpack.c.l.b16 %v1979
    %v2335 = vunpack.c.h.b16 %v1979
    %v2336 = vunpack.c.l.b16 %v1980
    %v2337 = vunpack.c.h.b16 %v1980
    %v2338 = vunpack.c.l.b16 %v1981
    %v2339 = vunpack.c.h.b16 %v1981
    %v2340 = vunpack.c.l.b16 %v1982
    %v2341 = vunpack.c.h.b16 %v1982
    %v2342 = vunpack.c.l.b16 %v1983
    %v2343 = vunpack.c.h.b16 %v1983
    %v2344 = vunpack.c.l.b16 %v1984
    %v2345 = vunpack.c.h.b16 %v1984
    %v2346 = vunpack.c.l.b16 %v1985
    %v2347 = vunpack.c.h.b16 %v1985
    %v2348 = vunpack.c.l.b16 %v1986
    %v2349 = vunpack.c.h.b16 %v1986
    %v2350 = vunpack.c.l.b16 %v1987
    %v2351 = vunpack.c.h.b16 %v1987
    %v2352 = vunpack.c.l.b16 %v1988
    %v2353 = vunpack.c.h.b16 %v1988
    %v2354 = vunpack.c.l.b16 %v1989
    %v2355 = vunpack.c.h.b16 %v1989
    %v2356 = vunpack.c.l.b16 %v1990
    %v2357 = vunpack.c.h.b16 %v1990
    %v2358 = vunpack.c.l.b16 %v1991
    %v2359 = vunpack.c.h.b16 %v1991
    %v2360 = vunpack.c.l.b16 %v1992
    %v2361 = vunpack.c.h.b16 %v1992
    %v2362 = vunpack.c.l.b16 %v1993
    %v2363 = vunpack.c.h.b16 %v1993
    %v2364 = vunpack.c.l.b16 %v1994
    %v2365 = vunpack.c.h.b16 %v1994
    %v2366 = vunpack.c.l.b16 %v1995
    %v2367 = vunpack.c.h.b16 %v1995
    %v2368 = vunpack.c.l.b16 %v1996
    %v2369 = vunpack.c.h.b16 %v1996
    %v2370 = vunpack.c.l.b16 %v1997
    %v2371 = vunpack.c.h.b16 %v1997
    %v2372 = vunpack.c.l.b16 %v1998
    %v2373 = vunpack.c.h.b16 %v1998
    %v2374 = vunpack.c.l.b16 %v1999
    %v2375 = vunpack.c.h.b16 %v1999
    %v2376 = vunpack.c.l.b16 %v2000
    %v2377 = vunpack.c.h.b16 %v2000
    %v2378 = vunpack.c.l.b16 %v2001
    %v2379 = vunpack.c.h.b16 %v2001
    %v2380 = vunpack.c.l.b16 %v2002
    %v2381 = vunpack.c.h.b16 %v2002
    %v2382 = vunpack.c.l.b16 %v2003
    %v2383 = vunpack.c.h.b16 %v2003
    %v2384 = vunpack.c.l.b16 %v2004
    %v2385 = vunpack.c.h.b16 %v2004
    %v2386 = vunpack.c.l.b16 %v2005
    %v2387 = vunpack.c.h.b16 %v2005
    %v2388 = vunpack.c.l.b16 %v2006
    %v2389 = vunpack.c.h.b16 %v2006
    %v2390 = vunpack.c.l.b16 %v2007
    %v2391 = vunpack.c.h.b16 %v2007
    %v2392 = vunpack.c.l.b16 %v2008
    %v2393 = vunpack.c.h.b16 %v2008
    %v2394 = vunpack.c.l.b16 %v2009
    %v2395 = vunpack.c.h.b16 %v2009
    %v2396 = vunpack.c.l.b16 %v2010
    %v2397 = vunpack.c.h.b16 %v2010
    %v2398 = vunpack.c.l.b16 %v2011
    %v2399 = vunpack.c.h.b16 %v2011
    %v2400 = vunpack.c.l.b16 %v2012
    %v2401 = vunpack.c.h.b16 %v2012
    %v2402 = vunpack.c.l.b16 %v2013
    %v2403 = vunpack.c.h.b16 %v2013
    %v2404 = vunpack.c.l.b16 %v2014
    %v2405 = vunpack.c.h.b16 %v2014
    %v2406 = vunpack.c.l.b16 %v2015
    %v2407 = vunpack.c.h.b16 %v2015
    %v2408 = vunpack.c.l.b16 %v2016
    %v2409 = vunpack.c.h.b16 %v2016
    %v2410 = vunpack.c.l.b16 %v2017
    %v2411 = vunpack.c.h.b16 %v2017
    %v2412 = vunpack.c.l.b16 %v2018
    %v2413 = vunpack.c.h.b16 %v2018
    %v2414 = vunpack.c.l.b16 %v2019
    %v2415 = vunpack.c.h.b16 %v2019
    %v2416 = vunpack.c.l.b16 %v2020
    %v2417 = vunpack.c.h.b16 %v2020
    %v2418 = vunpack.c.l.b16 %v2021
    %v2419 = vunpack.c.h.b16 %v2021
    %v2420 = vunpack.c.l.b16 %v2022
    %v2421 = vunpack.c.h.b16 %v2022
    %v2422 = vunpack.c.l.b16 %v2023
    %v2423 = vunpack.c.h.b16 %v2023
    %v2424 = vunpack.c.l.b16 %v2024
    %v2425 = vunpack.c.h.b16 %v2024
    %v2426 = vunpack.c.l.b16 %v2025
    %v2427 = vunpack.c.h.b16 %v2025
    %v2428 = vunpack.c.l.b16 %v2026
    %v2429 = vunpack.c.h.b16 %v2026
    %v2430 = vunpack.c.l.b16 %v2027
    %v2431 = vunpack.c.h.b16 %v2027
    %v2432 = vunpack.c.l.b16 %v2028
    %v2433 = vunpack.c.h.b16 %v2028
    %v2434 = vunpack.c.l.b16 %v2029
    %v2435 = vunpack.c.h.b16 %v2029
    %v2436 = vunpack.c.l.b16 %v2030
    %v2437 = vunpack.c.h.b16 %v2030
    %v2438 = vunpack.c.l.b16 %v2031
    %v2439 = vunpack.c.h.b16 %v2031
    %v2440 = vunpack.c.l.b16 %v2032
    %v2441 = vunpack.c.h.b16 %v2032
    %v2442 = vunpack.c.l.b16 %v2033
    %v2443 = vunpack.c.h.b16 %v2033
    %v2444 = vunpack.c.l.b16 %v2034
    %v2445 = vunpack.c.h.b16 %v2034
    %v2446 = vunpack.c.l.b16 %v2035
    %v2447 = vunpack.c.h.b16 %v2035
    %v2448 = vunpack.c.l.b16 %v2036
    %v2449 = vunpack.c.h.b16 %v2036
    %v2450 = vunpack.c.l.b16 %v2037
    %v2451 = vunpack.c.h.b16 %v2037
    %v2452 = vunpack.c.l.b16 %v2038
    %v2453 = vunpack.c.h.b16 %v2038
    %v2454 = vunpack.c.l.b16 %v2039
    %v2455 = vunpack.c.h.b16 %v2039
    %v2456 = vunpack.c.l.b16 %v2040
    %v2457 = vunpack.c.h.b16 %v2040
    %v2458 = vunpack.c.l.b16 %v2041
    %v2459 = vunpack.c.h.b16 %v2041
    %v2460 = vunpack.c.l.b16 %v2042
    %v2461 = vunpack.c.h.b16 %v2042
    %v2462 = vunpack.c.l.b16 %v2043
    %v2463 = vunpack.c.h.b16 %v2043
    %v2464 = vunpack.c.l.b16 %v2044
    %v2465 = vunpack.c.h.b16 %v2044
    %v2466 = vunpack.c.l.b16 %v2045
    %v2467 = vunpack.c.h.b16 %v2045
    %v2468 = vunpack.c.l.b16 %v2046
    %v2469 = vunpack.c.h.b16 %v2046
    %v2470 = vunpack.c.l.b16 %v2047
    %v2471 = vunpack.c.h.b16 %v2047
    %v2472 = vunpack.c.l.b16 %v2048
    %v2473 = vunpack.c.h.b16 %v2048
    %v2474 = vunpack.c.l.b16 %v2049
    %v2475 = vunpack.c.h.b16 %v2049
    %v2476 = vunpack.c.l.b16 %v2050
    %v2477 = vunpack.c.h.b16 %v2050
    %v2478 = vunpack.c.l.b16 %v2051
    %v2479 = vunpack.c.h.b16 %v2051
    %v2480 = vpack.c.b16 %v2232, %v2224
    %v2481 = vpack.c.b16 %v2233, %v2225
    %v2482 = vpack.c.b16 %v2234, %v2226
    %v2483 = vpack.c.b16 %v2235, %v2227
    %v2484 = vpack.c.b16 %v2236, %v2228
    %v2485 = vpack.c.b16 %v2237, %v2229
    %v2486 = vpack.c.b16 %v2238, %v2230
    %v2487 = vpack.c.b16 %v2239, %v2231
    %v2488 = vpack.c.b16 %v2248, %v2240
    %v2489 = vpack.c.b16 %v2249, %v2241
    %v2490 = vpack.c.b16 %v2250, %v2242
    %v2491 = vpack.c.b16 %v2251, %v2243
    %v2492 = vpack.c.b16 %v2252, %v2244
    %v2493 = vpack.c.b16 %v2253, %v2245
    %v2494 = vpack.c.b16 %v2254, %v2246
    %v2495 = vpack.c.b16 %v2255, %v2247
    %v2496 = vpack.c.b16 %v2264, %v2256
    %v2497 = vpack.c.b16 %v2265, %v2257
    %v2498 = vpack.c.b16 %v2266, %v2258
    %v2499 = vpack.c.b16 %v2267, %v2259
    %v2500 = vpack.c.b16 %v2268, %v2260
    %v2501 = vpack.c.b16 %v2269, %v2261
    %v2502 = vpack.c.b16 %v2270, %v2262
    %v2503 = vpack.c.b16 %v2271, %v2263
    %v2504 = vpack.c.b16 %v2280, %v2272
    %v2505 = vpack.c.b16 %v2281, %v2273
    %v2506 = vpack.c.b16 %v2282, %v2274
    %v2507 = vpack.c.b16 %v2283, %v2275
    %v2508 = vpack.c.b16 %v2284, %v2276
    %v2509 = vpack.c.b16 %v2285, %v2277
    %v2510 = vpack.c.b16 %v2286, %v2278
    %v2511 = vpack.c.b16 %v2287, %v2279
    %v2512 = vpack.c.b16 %v2296, %v2288
    %v2513 = vpack.c.b16 %v2297, %v2289
    %v2514 = vpack.c.b16 %v2298, %v2290
    %v2515 = vpack.c.b16 %v2299, %v2291
    %v2516 = vpack.c.b16 %v2300, %v2292
    %v2517 = vpack.c.b16 %v2301, %v2293
    %v2518 = vpack.c.b16 %v2302, %v2294
    %v2519 = vpack.c.b16 %v2303, %v2295
    %v2520 = vpack.c.b16 %v2312, %v2304
    %v2521 = vpack.c.b16 %v2313, %v2305
    %v2522 = vpack.c.b16 %v2314, %v2306
    %v2523 = vpack.c.b16 %v2315, %v2307
    %v2524 = vpack.c.b16 %v2316, %v2308
    %v2525 = vpack.c.b16 %v2317, %v2309
    %v2526 = vpack.c.b16 %v2318, %v2310
    %v2527 = vpack.c.b16 %v2319, %v2311
    %v2528 = vpack.c.b16 %v2328, %v2320
    %v2529 = vpack.c.b16 %v2329, %v2321
    %v2530 = vpack.c.b16 %v2330, %v2322
    %v2531 = vpack.c.b16 %v2331, %v2323
    %v2532 = vpack.c.b16 %v2332, %v2324
    %v2533 = vpack.c.b16 %v2333, %v2325
    %v2534 = vpack.c.b16 %v2334, %v2326
    %v2535 = vpack.c.b16 %v2335, %v2327
    %v2536 = vpack.c.b16 %v2344, %v2336
    %v2537 = vpack.c.b16 %v2345, %v2337
    %v2538 = vpack.c.b16 %v2346, %v2338
    %v2539 = vpack.c.b16 %v2347, %v2339
    %v2540 = vpack.c.b16 %v2348, %v2340
    %v2541 = vpack.c.b16 %v2349, %v2341
    %v2542 = vpack.c.b16 %v2350, %v2342
    %v2543 = vpack.c.b16 %v2351, %v2343
    %v2544 = vpack.c.b16 %v2360, %v2352
    %v2545 = vpack.c.b16 %v2361, %v2353
    %v2546 = vpack.c.b16 %v2362, %v2354
    %v2547 = vpack.c.b16 %v2363, %v2355
    %v2548 = vpack.c.b16 %v2364, %v2356
    %v2549 = vpack.c.b16 %v2365, %v2357
    %v2550 = vpack.c.b16 %v2366, %v2358
    %v2551 = vpack.c.b16 %v2367, %v2359
    %v2552 = vpack.c.b16 %v2376, %v2368
    %v2553 = vpack.c.b16 %v2377, %v2369
    %v2554 = vpack.c.b16 %v2378, %v2370
    %v2555 = vpack.c.b16 %v2379, %v2371
    %v2556 = vpack.c.b16 %v2380, %v2372
    %v2557 = vpack.c.b16 %v2381, %v2373
    %v2558 = vpack.c.b16 %v2382, %v2374
    %v2559 = vpack.c.b16 %v2383, %v2375
    %v2560 = vpack.c.b16 %v2392, %v2384
    %v2561 = vpack.c.b16 %v2393, %v2385
    %v2562 = vpack.c.b16 %v2394, %v2386
    %v2563 = vpack.c.b16 %v2395, %v2387
    %v2564 = vpack.c.b16 %v2396, %v2388
    %v2565 = vpack.c.b16 %v2397, %v2389
    %v2566 = vpack.c.b16 %v2398, %v2390
    %v2567 = vpack.c.b16 %v2399, %v2391
    %v2568 = vpack.c.b16 %v2408, %v2400
    %v2569 = vpack.c.b16 %v2409, %v2401
    %v2570 = vpack.c.b16 %v2410, %v2402
    %v2571 = vpack.c.b16 %v2411, %v2403
    %v2572 = vpack.c.b16 %v2412, %v2404
    %v2573 = vpack.c.b16 %v2413, %v2405
    %v2574 = vpack.c.b16 %v2414, %v2406
    %v2575 = vpack.c.b16 %v2415, %v2407
    %v2576 = vpack.c.b16 %v2424, %v2416
    %v2577 = vpack.c.b16 %v2425, %v2417
    %v2578 = vpack.c.b16 %v2426, %v2418
    %v2579 = vpack.c.b16 %v2427, %v2419
    %v2580 = vpack.c.b16 %v2428, %v2420
    %v2581 = vpack.c.b16 %v2429, %v2421
    %v2582 = vpack.c.b16 %v2430, %v2422
    %v2583 = vpack.c.b16 %v2431, %v2423
    %v2584 = vpack.c.b16 %v2440, %v2432
    %v2585 = vpack.c.b16 %v2441, %v2433
    %v2586 = vpack.c.b16 %v2442, %v2434
    %v2587 = vpack.c.b16 %v2443, %v2435
    %v2588 = vpack.c.b16 %v2444, %v2436
    %v2589 = vpack.c.b16 %v2445, %v2437
    %v2590 = vpack.c.b16 %v2446, %v2438
    %v2591 = vpack.c.b16 %v2447, %v2439
    %v2592 = vpack.c.b16 %v2456, %v2448
    %v2593 = vpack.c.b16 %v2457, %v2449
    %v2594 = vpack.c.b16 %v2458, %v2450
    %v2595 = vpack.c.b16 %v2459, %v2451
    %v2596 = vpack.c.b16 %v2460, %v2452
    %v2597 = vpack.c.b16 %v2461, %v2453
    %v2598 = vpack.c.b16 %v2462, %v2454
    %v2599 = vpack.c.b16 %v2463, %v2455
    %v2600 = vpack.c.b16 %v2472, %v2464
    %v2601 = vpack.c.b16 %v2473, %v2465
    %v2602 = vpack.c.b16 %v2474, %v2466
    %v2603 = vpack.c.b16 %v2475, %v2467
    %v2604 = vpack.c.b16 %v2476, %v2468
    %v2605 = vpack.c.b16 %v2477, %v2469
    %v2606 = vpack.c.b16 %v2478, %v2470
    %v2607 = vpack.c.b16 %v2479, %v2471
    %2736 = vmatprep.subr.bf16.mxu0 %v2537
    %2737 = vmatpush1.bf16.msra.mxu0 %v2536
    %2738 = vmatprep.subr.bf16.mxu0 %v2529
    %2739 = vmatpush1.bf16.msra.mxu0 %v2528
    %2740 = vmatprep.subr.bf16.mxu0 %v2521
    %2741 = vmatpush1.bf16.msra.mxu0 %v2520
    %2742 = vmatprep.subr.bf16.mxu0 %v2513
    %2743 = vmatpush1.bf16.msra.mxu0 %v2512
    %2744 = vmatprep.subr.bf16.mxu0 %v2505
    %2745 = vmatpush1.bf16.msra.mxu0 %v2504
    %2746 = vmatprep.subr.bf16.mxu0 %v2497
    %2747 = vmatpush1.bf16.msra.mxu0 %v2496
    %2748 = vmatprep.subr.bf16.mxu0 %v2489
    %2749 = vmatpush1.bf16.msra.mxu0 %v2488
    %2750 = vmatprep.subr.bf16.mxu0 %v2481
    %2751 = vmatpush1.bf16.msra.mxu0 %v2480
    %2752 = vmatprep.subr.bf16.mxu0 %v2601
    %2753 = vmatpush2.bf16.msra.mxu0 %v2600
    %2754 = vmatprep.subr.bf16.mxu0 %v2593
    %2755 = vmatpush2.bf16.msra.mxu0 %v2592
    %2756 = vmatprep.subr.bf16.mxu0 %v2585
    %2757 = vmatpush2.bf16.msra.mxu0 %v2584
    %2758 = vmatprep.subr.bf16.mxu0 %v2577
    %2759 = vmatpush2.bf16.msra.mxu0 %v2576
    %2760 = vmatprep.subr.bf16.mxu0 %v2569
    %2761 = vmatpush2.bf16.msra.mxu0 %v2568
    %2762 = vmatprep.subr.bf16.mxu0 %v2561
    %2763 = vmatpush2.bf16.msra.mxu0 %v2560
    %2764 = vmatprep.subr.bf16.mxu0 %v2553
    %2765 = vmatpush2.bf16.msra.mxu0 %v2552
    %2766 = vmatprep.subr.bf16.mxu0 %v2545
    %2767 = vmatpush2.bf16.msra.mxu0 %v2544
    %2768 = vmatprep.mubr.bf16.mxu0 %v2054
    %2769 = vmatmul.mubr.bf16.gmra.mxu0 %v2053
    %v2770 = vpop.f32.mrf.mxu0
    %v2771 = vadd.f32 %v2059, %v2770
    %v2772 = vpop.f32.mrf.mxu0
    %v2773 = vadd.f32 %v2063, %v2772
    %v2774 = vpop.f32.mrf.mxu0
    %v2775 = vpop.f32.mrf.mxu0
    %2776 = vdwg.mxu0
    %2777 = vmatprep.subr.bf16.mxu0 %v2539
    %2778 = vmatpush1.bf16.msra.mxu0 %v2538
    %2779 = vmatprep.subr.bf16.mxu0 %v2531
    %2780 = vmatpush1.bf16.msra.mxu0 %v2530
    %2781 = vmatprep.subr.bf16.mxu0 %v2523
    %2782 = vmatpush1.bf16.msra.mxu0 %v2522
    %2783 = vmatprep.subr.bf16.mxu0 %v2515
    %2784 = vmatpush1.bf16.msra.mxu0 %v2514
    %2785 = vmatprep.subr.bf16.mxu0 %v2507
    %2786 = vmatpush1.bf16.msra.mxu0 %v2506
    %2787 = vmatprep.subr.bf16.mxu0 %v2499
    %2788 = vmatpush1.bf16.msra.mxu0 %v2498
    %2789 = vmatprep.subr.bf16.mxu0 %v2491
    %2790 = vmatpush1.bf16.msra.mxu0 %v2490
    %2791 = vmatprep.subr.bf16.mxu0 %v2483
    %2792 = vmatpush1.bf16.msra.mxu0 %v2482
    %2793 = vmatprep.subr.bf16.mxu0 %v2603
    %2794 = vmatpush2.bf16.msra.mxu0 %v2602
    %2795 = vmatprep.subr.bf16.mxu0 %v2595
    %2796 = vmatpush2.bf16.msra.mxu0 %v2594
    %2797 = vmatprep.subr.bf16.mxu0 %v2587
    %2798 = vmatpush2.bf16.msra.mxu0 %v2586
    %2799 = vmatprep.subr.bf16.mxu0 %v2579
    %2800 = vmatpush2.bf16.msra.mxu0 %v2578
    %2801 = vmatprep.subr.bf16.mxu0 %v2571
    %2802 = vmatpush2.bf16.msra.mxu0 %v2570
    %2803 = vmatprep.subr.bf16.mxu0 %v2563
    %2804 = vmatpush2.bf16.msra.mxu0 %v2562
    %2805 = vmatprep.subr.bf16.mxu0 %v2555
    %2806 = vmatpush2.bf16.msra.mxu0 %v2554
    %2807 = vmatprep.subr.bf16.mxu0 %v2547
    %2808 = vmatpush2.bf16.msra.mxu0 %v2546
    %2809 = vmatprep.mubr.bf16.mxu0 %v2054
    %2810 = vmatmul.mubr.bf16.gmra.mxu0 %v2053
    %v2811 = vpop.f32.mrf.mxu0
    %v2812 = vadd.f32 %v2067, %v2811
    %v2813 = vpop.f32.mrf.mxu0
    %v2814 = vadd.f32 %v2071, %v2813
    %v2815 = vpop.f32.mrf.mxu0
    %v2816 = vpop.f32.mrf.mxu0
    %2817 = vdwg.mxu0
    %2818 = vmatprep.subr.bf16.mxu0 %v2541
    %2819 = vmatpush1.bf16.msra.mxu0 %v2540
    %2820 = vmatprep.subr.bf16.mxu0 %v2533
    %2821 = vmatpush1.bf16.msra.mxu0 %v2532
    %2822 = vmatprep.subr.bf16.mxu0 %v2525
    %2823 = vmatpush1.bf16.msra.mxu0 %v2524
    %2824 = vmatprep.subr.bf16.mxu0 %v2517
    %2825 = vmatpush1.bf16.msra.mxu0 %v2516
    %2826 = vmatprep.subr.bf16.mxu0 %v2509
    %2827 = vmatpush1.bf16.msra.mxu0 %v2508
    %2828 = vmatprep.subr.bf16.mxu0 %v2501
    %2829 = vmatpush1.bf16.msra.mxu0 %v2500
    %2830 = vmatprep.subr.bf16.mxu0 %v2493
    %2831 = vmatpush1.bf16.msra.mxu0 %v2492
    %2832 = vmatprep.subr.bf16.mxu0 %v2485
    %2833 = vmatpush1.bf16.msra.mxu0 %v2484
    %2834 = vmatprep.subr.bf16.mxu0 %v2605
    %2835 = vmatpush2.bf16.msra.mxu0 %v2604
    %2836 = vmatprep.subr.bf16.mxu0 %v2597
    %2837 = vmatpush2.bf16.msra.mxu0 %v2596
    %2838 = vmatprep.subr.bf16.mxu0 %v2589
    %2839 = vmatpush2.bf16.msra.mxu0 %v2588
    %2840 = vmatprep.subr.bf16.mxu0 %v2581
    %2841 = vmatpush2.bf16.msra.mxu0 %v2580
    %2842 = vmatprep.subr.bf16.mxu0 %v2573
    %2843 = vmatpush2.bf16.msra.mxu0 %v2572
    %2844 = vmatprep.subr.bf16.mxu0 %v2565
    %2845 = vmatpush2.bf16.msra.mxu0 %v2564
    %2846 = vmatprep.subr.bf16.mxu0 %v2557
    %2847 = vmatpush2.bf16.msra.mxu0 %v2556
    %2848 = vmatprep.subr.bf16.mxu0 %v2549
    %2849 = vmatpush2.bf16.msra.mxu0 %v2548
    %2850 = vmatprep.mubr.bf16.mxu0 %v2054
    %2851 = vmatmul.mubr.bf16.gmra.mxu0 %v2053
    %v2852 = vpop.f32.mrf.mxu0
    %v2853 = vadd.f32 %v2075, %v2852
    %v2854 = vpop.f32.mrf.mxu0
    %v2855 = vadd.f32 %v2079, %v2854
    %v2856 = vpop.f32.mrf.mxu0
    %v2857 = vpop.f32.mrf.mxu0
    %2858 = vdwg.mxu0
    %2859 = vmatprep.subr.bf16.mxu0 %v2543
    %2860 = vmatpush1.bf16.msra.mxu0 %v2542
    %2861 = vmatprep.subr.bf16.mxu0 %v2535
    %2862 = vmatpush1.bf16.msra.mxu0 %v2534
    %2863 = vmatprep.subr.bf16.mxu0 %v2527
    %2864 = vmatpush1.bf16.msra.mxu0 %v2526
    %2865 = vmatprep.subr.bf16.mxu0 %v2519
    %2866 = vmatpush1.bf16.msra.mxu0 %v2518
    %2867 = vmatprep.subr.bf16.mxu0 %v2511
    %2868 = vmatpush1.bf16.msra.mxu0 %v2510
    %2869 = vmatprep.subr.bf16.mxu0 %v2503
    %2870 = vmatpush1.bf16.msra.mxu0 %v2502
    %2871 = vmatprep.subr.bf16.mxu0 %v2495
    %2872 = vmatpush1.bf16.msra.mxu0 %v2494
    %2873 = vmatprep.subr.bf16.mxu0 %v2487
    %2874 = vmatpush1.bf16.msra.mxu0 %v2486
    %2875 = vmatprep.subr.bf16.mxu0 %v2607
    %2876 = vmatpush2.bf16.msra.mxu0 %v2606
    %2877 = vmatprep.subr.bf16.mxu0 %v2599
    %2878 = vmatpush2.bf16.msra.mxu0 %v2598
    %2879 = vmatprep.subr.bf16.mxu0 %v2591
    %2880 = vmatpush2.bf16.msra.mxu0 %v2590
    %2881 = vmatprep.subr.bf16.mxu0 %v2583
    %2882 = vmatpush2.bf16.msra.mxu0 %v2582
    %2883 = vmatprep.subr.bf16.mxu0 %v2575
    %2884 = vmatpush2.bf16.msra.mxu0 %v2574
    %2885 = vmatprep.subr.bf16.mxu0 %v2567
    %2886 = vmatpush2.bf16.msra.mxu0 %v2566
    %2887 = vmatprep.subr.bf16.mxu0 %v2559
    %2888 = vmatpush2.bf16.msra.mxu0 %v2558
    %2889 = vmatprep.subr.bf16.mxu0 %v2551
    %2890 = vmatpush2.bf16.msra.mxu0 %v2550
    %2891 = vmatprep.mubr.bf16.mxu0 %v2054
    %2892 = vmatmul.mubr.bf16.gmra.mxu0 %v2053
    %v2893 = vpop.f32.mrf.mxu0
    %v2894 = vadd.f32 %v2083, %v2893
    %v2895 = vpop.f32.mrf.mxu0
    %v2896 = vadd.f32 %v2087, %v2895
    %v2897 = vpop.f32.mrf.mxu0
    %v2898 = vpop.f32.mrf.mxu0
    %2899 = vdwg.mxu0
    %v2900 = vxor.u32 %v2771, 2147483648
    %v2901 = vxor.u32 %v2773, 2147483648
    %v2902 = vxor.u32 %v2812, 2147483648
    %v2903 = vxor.u32 %v2814, 2147483648
    %v2904 = vxor.u32 %v2853, 2147483648
    %v2905 = vxor.u32 %v2855, 2147483648
    %v2906 = vxor.u32 %v2894, 2147483648
    %v2907 = vxor.u32 %v2896, 2147483648
    %v2908 = vmul.f32 %v2900, 1.442695
    %v2909 = vpow.pop %v2908
    %v2910 = vmul.f32 %v2901, 1.442695
    %v2911 = vpow.pop %v2910
    %v2912 = vmul.f32 %v2902, 1.442695
    %v2913 = vpow.pop %v2912
    %v2914 = vmul.f32 %v2903, 1.442695
    %v2915 = vpow.pop %v2914
    %v2916 = vmul.f32 %v2904, 1.442695
    %v2917 = vpow.pop %v2916
    %v2918 = vmul.f32 %v2905, 1.442695
    %v2919 = vpow.pop %v2918
    %v2920 = vmul.f32 %v2906, 1.442695
    %v2921 = vpow.pop %v2920
    %v2922 = vmul.f32 %v2907, 1.442695
    %v2923 = vpow.pop %v2922
    %v2924 = vadd.f32 %v2909, 1.0
    %v2925 = vadd.f32 %v2911, 1.0
    %v2926 = vadd.f32 %v2913, 1.0
    %v2927 = vadd.f32 %v2915, 1.0
    %v2928 = vadd.f32 %v2917, 1.0
    %v2929 = vadd.f32 %v2919, 1.0
    %v2930 = vadd.f32 %v2921, 1.0
    %v2931 = vadd.f32 %v2923, 1.0
    %v2932 = vrcp.pop %v2924
    %v2933 = vmul.f32 1.0, %v2932
    %v2934 = vrcp.pop %v2925
    %v2935 = vmul.f32 1.0, %v2934
    %v2936 = vrcp.pop %v2926
    %v2937 = vmul.f32 1.0, %v2936
    %v2938 = vrcp.pop %v2927
    %v2939 = vmul.f32 1.0, %v2938
    %v2940 = vrcp.pop %v2928
    %v2941 = vmul.f32 1.0, %v2940
    %v2942 = vrcp.pop %v2929
    %v2943 = vmul.f32 1.0, %v2942
    %v2944 = vrcp.pop %v2930
    %v2945 = vmul.f32 1.0, %v2944
    %v2946 = vrcp.pop %v2931
    %v2947 = vmul.f32 1.0, %v2946
    %2948 = vst [vmem:[#allocation22] sm:$0xff] %v2933
    %2949 = vst [vmem:[#allocation22 + $0x8] sm:$0xff] %v2935
    %2950 = vst [vmem:[#allocation22 + $0x10] sm:$0xff] %v2937
    %2951 = vst [vmem:[#allocation22 + $0x18] sm:$0xff] %v2939
    %2952 = vst [vmem:[#allocation22 + $0x20] sm:$0xff] %v2941
    %2953 = vst [vmem:[#allocation22 + $0x28] sm:$0xff] %v2943
    %2954 = vst [vmem:[#allocation22 + $0x30] sm:$0xff] %v2945
    %2955 = vst [vmem:[#allocation22 + $0x38] sm:$0xff] %v2947
    // Predicated region
    $region126: #{tpu_custom_call.1} parent=1 // pred_check
      _
    $region127: #{tpu_custom_call.1} parent=1 // pred_check_branch
      %2957 = sbr.rel (0) target = $region129
    $region128: #{tpu_custom_call.1} parent=1 // pred_region
      %s2959 = ssub.s32 1024, 1024
      %2960 = vsyncadd [#allocation4], %s2959
      %s2962 = sshll.u32 [#allocation22], 4
      %s2963 = int_to_ptr.vmem [resolvable:$true] %s2962
      %2965 = dma.vmem_to_hbm [thread:$0]  %s2963, 1024, %s19, [#allocation4]
    $region129: #{tpu_custom_call.1} parent=1 // pred_fallthru
      _
    // Predicated region
    $region130: #{tpu_custom_call.1} parent=1 // pred_check
      _
    $region131: #{tpu_custom_call.1} parent=1 // pred_check_branch
      %2967 = sbr.rel (0) target = $region133
    $region132: #{tpu_custom_call.1} parent=1 // pred_region
      %2968 = dma.done [#allocation4], 1024
    $region133: #{tpu_custom_call.1} parent=1 // pred_fallthru
      _
    %2969 = vsyncpa [#allocation3], 1
    %2970 = vsyncpa [#allocation6], 1
    %2971 = vsyncpa [#allocation9], 1
    %2972 = vsyncpa [#allocation12], 1
    %2973 = vsyncpa [#allocation15], 1
    %2974 = vsyncpa [#allocation18], 1
    %2975 = vsyncpa [#allocation21], 1
    %2976 = vsyncpa [#allocation4], 1

</llo_original>
